<compile_context>
chip_gen: v5e
topology: v5e:2x2
jax: 0.10.0
libtpu: 0.0.40
codegen_flags: <defaults>
</compile_context>

<pallas_src>
import math

import jax
import jax.numpy as jnp
from jax.experimental import pallas as pl
from jax.experimental.pallas import tpu as pltpu

HIDDEN_DIM = 16
STATE_DIM = 5
INPUT_DIM = STATE_DIM * 2          # 10
BOTTLENECK = HIDDEN_DIM // 2       # 8

# Lane padding makes a (tile, 10) f32 block cost tile * 128 * 4 bytes of VMEM
# (~4 MiB at 8192).  in + out double-buffered blocks + intermediates stay
# < ~32 MiB, comfortably inside the 48 MiB limit requested below on every
# TPU generation (incl. v7x's 64 MiB physical VMEM).
MAX_BATCH_TILE = 8192
VMEM_LIMIT_BYTES = 48 * 1024 * 1024
SMALL_BATCH_CUTOFF = 1024


def _ae_kernel(x_ref,
               w1_ref, b1_ref,
               w2_ref, b2_ref,
               w3_ref, b3_ref,
               w4_ref, b4_ref,
               out_ref):
    """Fused 4-layer MLP forward on one (batch_tile, 10) tile (batch-major)."""
    x = x_ref[...].astype(jnp.float32)                                # (T, 10)

    # encoder: Linear(10,16) + ReLU
    h = jnp.dot(x, w1_ref[...], preferred_element_type=jnp.float32) + b1_ref[...]
    h = jnp.maximum(h, 0.0)                                           # (T, 16)

    # encoder: Linear(16,8) + ReLU
    h = jnp.dot(h, w2_ref[...], preferred_element_type=jnp.float32) + b2_ref[...]
    h = jnp.maximum(h, 0.0)                                           # (T, 8)

    # decoder: Linear(8,16) + ReLU
    h = jnp.dot(h, w3_ref[...], preferred_element_type=jnp.float32) + b3_ref[...]
    h = jnp.maximum(h, 0.0)                                           # (T, 16)

    # decoder: Linear(16,10) (no activation)
    y = jnp.dot(h, w4_ref[...], preferred_element_type=jnp.float32) + b4_ref[...]
    out_ref[...] = y.astype(out_ref.dtype)                            # (T, 10)


def _round_up(x, m):
    return (x + m - 1) // m * m


def _pick_batch_tile(batch):
    """Multiple of 128, as large as MAX_BATCH_TILE allows, while targeting an
    EVEN number of grid steps (>=2) so the `parallel` batch axis splits evenly
    across v7x's two TensorCores (irrelevant but harmless on v5e/v6e)."""
    if batch <= 128:
        return 128
    steps = 2
    while _round_up(pl.cdiv(batch, steps), 128) > MAX_BATCH_TILE:
        steps += 2
    return _round_up(pl.cdiv(batch, steps), 128)


def autoencoder_forward(x, params, *, batch_tile=None, use_pallas=None):
    """x: (B, INPUT_DIM).  params: dict with w1..w4 as (in_features, out_features)
    (i.e. the transpose of PyTorch's nn.Linear weight, prepared once at init)
    and b1..b4 as (1, out_features).  Returns (B, INPUT_DIM) in x.dtype."""
    B, D = x.shape
    assert D == INPUT_DIM

    if use_pallas is None:
        use_pallas = B >= SMALL_BATCH_CUTOFF
    if not use_pallas:
        # Tiny batches: fixed kernel-launch / pipeline overhead dominates;
        # plain fused XLA is faster.
        return reference_forward(x, params).astype(x.dtype)

    if batch_tile is None:
        batch_tile = _pick_batch_tile(B)
    assert batch_tile % 128 == 0, "batch_tile must be a multiple of 128"

    num_tiles = pl.cdiv(B, batch_tile)          # last block may be partial

    def x_map(i):
        return (i, 0)

    def rep(i):
        return (0, 0)

    in_specs = [
        pl.BlockSpec((batch_tile, INPUT_DIM), x_map),                 # x  (T, 10)
        pl.BlockSpec((INPUT_DIM, HIDDEN_DIM), rep),                   # w1 (10, 16)
        pl.BlockSpec((1, HIDDEN_DIM), rep),                           # b1 (1, 16)
        pl.BlockSpec((HIDDEN_DIM, BOTTLENECK), rep),                  # w2 (16, 8)
        pl.BlockSpec((1, BOTTLENECK), rep),                           # b2 (1, 8)
        pl.BlockSpec((BOTTLENECK, HIDDEN_DIM), rep),                  # w3 (8, 16)
        pl.BlockSpec((1, HIDDEN_DIM), rep),                           # b3 (1, 16)
        pl.BlockSpec((HIDDEN_DIM, INPUT_DIM), rep),                   # w4 (16, 10)
        pl.BlockSpec((1, INPUT_DIM), rep),                            # b4 (1, 10)
    ]
    out_spec = pl.BlockSpec((batch_tile, INPUT_DIM), x_map)

    return pl.pallas_call(
        _ae_kernel,
        out_shape=jax.ShapeDtypeStruct((B, INPUT_DIM), x.dtype),
        grid=(num_tiles,),
        in_specs=in_specs,
        out_specs=out_spec,
        compiler_params=pltpu.CompilerParams(
            dimension_semantics=("parallel",),
            vmem_limit_bytes=VMEM_LIMIT_BYTES,
        ),
    )(x,
      params["w1"], params["b1"],
      params["w2"], params["b2"],
      params["w3"], params["b3"],
      params["w4"], params["b4"])


def init_params(key):
    """PyTorch-style nn.Linear init (U[-1/sqrt(fan_in), 1/sqrt(fan_in)]).
    Weights are stored pre-transposed as (in_features, out_features) so the
    kernel computes x @ w + b with no transposes anywhere; biases are
    (1, out_features)."""
    dims = [
        (INPUT_DIM, HIDDEN_DIM),
        (HIDDEN_DIM, BOTTLENECK),
        (BOTTLENECK, HIDDEN_DIM),
        (HIDDEN_DIM, INPUT_DIM),
    ]
    params = {}
    for idx, (fan_in, fan_out) in enumerate(dims, start=1):
        key, kw, kb = jax.random.split(key, 3)
        bound = 1.0 / math.sqrt(fan_in)
        params[f"w{idx}"] = jax.random.uniform(
            kw, (fan_in, fan_out), jnp.float32, minval=-bound, maxval=bound)
        params[f"b{idx}"] = jax.random.uniform(
            kb, (1, fan_out), jnp.float32, minval=-bound, maxval=bound)
    return params


def reference_forward(x, params):
    """Pure-JAX reference matching the PyTorch module's forward."""
    xf = x.astype(jnp.float32)
    h = jnp.maximum(xf @ params["w1"] + params["b1"], 0.0)
    h = jnp.maximum(h @ params["w2"] + params["b2"], 0.0)
    h = jnp.maximum(h @ params["w3"] + params["b3"], 0.0)
    return h @ params["w4"] + params["b4"]


if __name__ == "__main__":
    key = jax.random.PRNGKey(0)
    key, kx = jax.random.split(key)

    # Small but non-trivial batch: not a multiple of 128 (exercises the
    # partial-last-block masking path) and gives a 2-step parallel grid with
    # batch_tile=256 (exercises pipelining / v7x megacore split).
    batch = 300
    x = jax.random.normal(kx, (batch, INPUT_DIM), jnp.float32)
    params = init_params(key)

    out = autoencoder_forward(x, params, use_pallas=True)
    out = jax.block_until_ready(out)

    ref = reference_forward(x, params)
    assert out.shape == (batch, INPUT_DIM)
    assert jnp.allclose(out, ref, atol=1e-5, rtol=1e-5), "mismatch vs JAX reference"

    print("KERNEL_OK")
</pallas_src>

<mosaic_0001>
module attributes {stable_mosaic.version = 11 : i64} {
  func.func @_ae_kernel(%arg0: i32, %arg1: memref<256x10xf32, #tpu.memory_space<vmem>>, %arg2: memref<10x16xf32, #tpu.memory_space<vmem>>, %arg3: memref<1x16xf32, #tpu.memory_space<vmem>>, %arg4: memref<16x8xf32, #tpu.memory_space<vmem>>, %arg5: memref<1x8xf32, #tpu.memory_space<vmem>>, %arg6: memref<8x16xf32, #tpu.memory_space<vmem>>, %arg7: memref<1x16xf32, #tpu.memory_space<vmem>>, %arg8: memref<16x10xf32, #tpu.memory_space<vmem>>, %arg9: memref<1x10xf32, #tpu.memory_space<vmem>>, %arg10: memref<256x10xf32, #tpu.memory_space<vmem>>) attributes {dimension_semantics = [#tpu.dimension_semantics<parallel>], iteration_bounds = array<i64: 2>, scalar_prefetch = 0 : i64, scratch_operands = 0 : i64, tpu.core_type = #tpu.core_type<tc>, window_params = [{transform_indices = @transform_0, window_bounds = array<i64: 256, 10>}, {pipeline_mode = #tpu.pipeline_mode<synchronous>, transform_indices = @transform_1, window_bounds = array<i64: 10, 16>}, {pipeline_mode = #tpu.pipeline_mode<synchronous>, transform_indices = @transform_2, window_bounds = array<i64: 1, 16>}, {pipeline_mode = #tpu.pipeline_mode<synchronous>, transform_indices = @transform_3, window_bounds = array<i64: 16, 8>}, {pipeline_mode = #tpu.pipeline_mode<synchronous>, transform_indices = @transform_4, window_bounds = array<i64: 1, 8>}, {pipeline_mode = #tpu.pipeline_mode<synchronous>, transform_indices = @transform_5, window_bounds = array<i64: 8, 16>}, {pipeline_mode = #tpu.pipeline_mode<synchronous>, transform_indices = @transform_6, window_bounds = array<i64: 1, 16>}, {pipeline_mode = #tpu.pipeline_mode<synchronous>, transform_indices = @transform_7, window_bounds = array<i64: 16, 10>}, {pipeline_mode = #tpu.pipeline_mode<synchronous>, transform_indices = @transform_8, window_bounds = array<i64: 1, 10>}, {transform_indices = @transform_9, window_bounds = array<i64: 256, 10>}]} {
    %c0 = arith.constant 0 : index
    %c0_0 = arith.constant 0 : index
    %0 = vector.load %arg1[%c0, %c0_0] : memref<256x10xf32, #tpu.memory_space<vmem>>, vector<256x10xf32>
    %c0_1 = arith.constant 0 : index
    %c0_2 = arith.constant 0 : index
    %1 = vector.load %arg2[%c0_1, %c0_2] : memref<10x16xf32, #tpu.memory_space<vmem>>, vector<10x16xf32>
    %cst = arith.constant dense<0.000000e+00> : vector<256x16xf32>
    %2 = tpu.matmul %0, %1, %cst {dimension_numbers = #tpu.dot_dimension_numbers<[1], [0], [0], [1], [0, 0, 1, 1], [], []>} : vector<256x10xf32>, vector<10x16xf32>, vector<256x16xf32> -> vector<256x16xf32>
    %c0_3 = arith.constant 0 : index
    %c0_4 = arith.constant 0 : index
    %3 = vector.load %arg3[%c0_3, %c0_4] : memref<1x16xf32, #tpu.memory_space<vmem>>, vector<1x16xf32>
    %4 = vector.broadcast %3 : vector<1x16xf32> to vector<256x16xf32>
    %5 = arith.addf %2, %4 : vector<256x16xf32>
    %cst_5 = arith.constant 0.000000e+00 : f32
    %6 = vector.broadcast %cst_5 : f32 to vector<256x16xf32>
    %7 = arith.maximumf %5, %6 : vector<256x16xf32>
    %c0_6 = arith.constant 0 : index
    %c0_7 = arith.constant 0 : index
    %8 = vector.load %arg4[%c0_6, %c0_7] : memref<16x8xf32, #tpu.memory_space<vmem>>, vector<16x8xf32>
    %cst_8 = arith.constant dense<0.000000e+00> : vector<256x8xf32>
    %9 = tpu.matmul %7, %8, %cst_8 {dimension_numbers = #tpu.dot_dimension_numbers<[1], [0], [0], [1], [0, 0, 1, 1], [], []>} : vector<256x16xf32>, vector<16x8xf32>, vector<256x8xf32> -> vector<256x8xf32>
    %c0_9 = arith.constant 0 : index
    %c0_10 = arith.constant 0 : index
    %10 = vector.load %arg5[%c0_9, %c0_10] : memref<1x8xf32, #tpu.memory_space<vmem>>, vector<1x8xf32>
    %11 = vector.broadcast %10 : vector<1x8xf32> to vector<256x8xf32>
    %12 = arith.addf %9, %11 : vector<256x8xf32>
    %cst_11 = arith.constant 0.000000e+00 : f32
    %13 = vector.broadcast %cst_11 : f32 to vector<256x8xf32>
    %14 = arith.maximumf %12, %13 : vector<256x8xf32>
    %c0_12 = arith.constant 0 : index
    %c0_13 = arith.constant 0 : index
    %15 = vector.load %arg6[%c0_12, %c0_13] : memref<8x16xf32, #tpu.memory_space<vmem>>, vector<8x16xf32>
    %cst_14 = arith.constant dense<0.000000e+00> : vector<256x16xf32>
    %16 = tpu.matmul %14, %15, %cst_14 {dimension_numbers = #tpu.dot_dimension_numbers<[1], [0], [0], [1], [0, 0, 1, 1], [], []>} : vector<256x8xf32>, vector<8x16xf32>, vector<256x16xf32> -> vector<256x16xf32>
    %c0_15 = arith.constant 0 : index
    %c0_16 = arith.constant 0 : index
    %17 = vector.load %arg7[%c0_15, %c0_16] : memref<1x16xf32, #tpu.memory_space<vmem>>, vector<1x16xf32>
    %18 = vector.broadcast %17 : vector<1x16xf32> to vector<256x16xf32>
    %19 = arith.addf %16, %18 : vector<256x16xf32>
    %cst_17 = arith.constant 0.000000e+00 : f32
    %20 = vector.broadcast %cst_17 : f32 to vector<256x16xf32>
    %21 = arith.maximumf %19, %20 : vector<256x16xf32>
    %c0_18 = arith.constant 0 : index
    %c0_19 = arith.constant 0 : index
    %22 = vector.load %arg8[%c0_18, %c0_19] : memref<16x10xf32, #tpu.memory_space<vmem>>, vector<16x10xf32>
    %cst_20 = arith.constant dense<0.000000e+00> : vector<256x10xf32>
    %23 = tpu.matmul %21, %22, %cst_20 {dimension_numbers = #tpu.dot_dimension_numbers<[1], [0], [0], [1], [0, 0, 1, 1], [], []>} : vector<256x16xf32>, vector<16x10xf32>, vector<256x10xf32> -> vector<256x10xf32>
    %c0_21 = arith.constant 0 : index
    %c0_22 = arith.constant 0 : index
    %24 = vector.load %arg9[%c0_21, %c0_22] : memref<1x10xf32, #tpu.memory_space<vmem>>, vector<1x10xf32>
    %25 = vector.broadcast %24 : vector<1x10xf32> to vector<256x10xf32>
    %26 = arith.addf %23, %25 : vector<256x10xf32>
    %c0_23 = arith.constant 0 : index
    %c0_24 = arith.constant 0 : index
    %27 = vector.load %arg10[%c0_23, %c0_24] : memref<256x10xf32, #tpu.memory_space<vmem>>, vector<256x10xf32>
    tpu.vector_store %arg10[%c0_23, %c0_24], %26 {strides = array<i32>} : memref<256x10xf32, #tpu.memory_space<vmem>>, vector<256x10xf32>,
    return
  }
  func.func @transform_0(%arg0: i32) -> (i32, i32) {
    %c0_i32 = arith.constant 0 : i32
    %c0_i32_0 = arith.constant 0 : i32
    return %arg0, %c0_i32 : i32, i32
  }
  func.func @transform_1(%arg0: i32) -> (i32, i32) {
    %c0_i32 = arith.constant 0 : i32
    %c0_i32_0 = arith.constant 0 : i32
    %c0_i32_1 = arith.constant 0 : i32
    return %c0_i32, %c0_i32_0 : i32, i32
  }
  func.func @transform_2(%arg0: i32) -> (i32, i32) {
    %c0_i32 = arith.constant 0 : i32
    %c0_i32_0 = arith.constant 0 : i32
    %c0_i32_1 = arith.constant 0 : i32
    return %c0_i32, %c0_i32_0 : i32, i32
  }
  func.func @transform_3(%arg0: i32) -> (i32, i32) {
    %c0_i32 = arith.constant 0 : i32
    %c0_i32_0 = arith.constant 0 : i32
    %c0_i32_1 = arith.constant 0 : i32
    return %c0_i32, %c0_i32_0 : i32, i32
  }
  func.func @transform_4(%arg0: i32) -> (i32, i32) {
    %c0_i32 = arith.constant 0 : i32
    %c0_i32_0 = arith.constant 0 : i32
    %c0_i32_1 = arith.constant 0 : i32
    return %c0_i32, %c0_i32_0 : i32, i32
  }
  func.func @transform_5(%arg0: i32) -> (i32, i32) {
    %c0_i32 = arith.constant 0 : i32
    %c0_i32_0 = arith.constant 0 : i32
    %c0_i32_1 = arith.constant 0 : i32
    return %c0_i32, %c0_i32_0 : i32, i32
  }
  func.func @transform_6(%arg0: i32) -> (i32, i32) {
    %c0_i32 = arith.constant 0 : i32
    %c0_i32_0 = arith.constant 0 : i32
    %c0_i32_1 = arith.constant 0 : i32
    return %c0_i32, %c0_i32_0 : i32, i32
  }
  func.func @transform_7(%arg0: i32) -> (i32, i32) {
    %c0_i32 = arith.constant 0 : i32
    %c0_i32_0 = arith.constant 0 : i32
    %c0_i32_1 = arith.constant 0 : i32
    return %c0_i32, %c0_i32_0 : i32, i32
  }
  func.func @transform_8(%arg0: i32) -> (i32, i32) {
    %c0_i32 = arith.constant 0 : i32
    %c0_i32_0 = arith.constant 0 : i32
    %c0_i32_1 = arith.constant 0 : i32
    return %c0_i32, %c0_i32_0 : i32, i32
  }
  func.func @transform_9(%arg0: i32) -> (i32, i32) {
    %c0_i32 = arith.constant 0 : i32
    %c0_i32_0 = arith.constant 0 : i32
    return %arg0, %c0_i32 : i32, i32
  }
}

</mosaic_0001>

<llo_original>
// kernel: tpu_custom_call.1
$region0: #{tpu_custom_call.1}
  #allocation0 [shape = 'u32[]', space=smem, size = 0x4, offset = 0x4, fixed_abs, tag = 'smem constant byte address 0x4 - core index']
  #allocation1 [shape = 'u32[72,128]{1,0:T(1,128)}', space=vmem, size = 0x9000, scoped, tag = 'internal scratch']
  %s0 = inlined_call_operand.vmem [shape: f32[300,10], index: 0, kind: input, shape index: {}]
  %s1 = inlined_call_operand.vmem [shape: f32[10,16], index: 1, kind: input, shape index: {}]
  %s2 = inlined_call_operand.vmem [shape: f32[1,16], index: 2, kind: input, shape index: {}]
  %s3 = inlined_call_operand.vmem [shape: f32[16,8], index: 3, kind: input, shape index: {}]
  %s4 = inlined_call_operand.vmem [shape: f32[1,8], index: 4, kind: input, shape index: {}]
  %s5 = inlined_call_operand.vmem [shape: f32[8,16], index: 5, kind: input, shape index: {}]
  %s6 = inlined_call_operand.vmem [shape: f32[1,16], index: 6, kind: input, shape index: {}]
  %s7 = inlined_call_operand.vmem [shape: f32[16,10], index: 7, kind: input, shape index: {}]
  %s8 = inlined_call_operand.vmem [shape: f32[1,10], index: 8, kind: input, shape index: {}]
  %s9 = inlined_call_operand.vmem [shape: f32[300,10], index: 9, kind: output, shape index: {}]
  %s10 = sld [smem:[#allocation0]]
  $region117: #{tpu_custom_call.1} parent=0
    _
  %s12 = ssub.s32 1, %s10
  %s13 = scalar_select 0, %s12, %s10
  $region1: #{tpu_custom_call.1} parent=0
    #allocation2 [shape = 'u8[262144]{0}', space=vmem, size = 0x40000, scoped, tag = 'output window, operand 0']
    loop: start=0, step=1, limit=4
    $region2: #{tpu_custom_call.1} parent=1 // loop_pre_header
      _
    $region3: #{tpu_custom_call.1} parent=1 // loop_header
      %s15 = sphi 0, %s19
      %p16 = scmp.ge.s32.totalorder %s15, 4
      %s25 = sphi 0, %s27
      %s28 = sphi 0, %s25
      %s29 = sphi 0, %s28
      %s45 = sphi 0, %s29
      %s49 = sphi 0, %s49
      %s51 = sphi 0, %s49
      %s52 = sphi 0, %s51
      %s66 = sphi 0, %s52
      %s70 = sphi 0, %s70
      %s72 = sphi 0, %s70
      %s73 = sphi 0, %s72
      %s87 = sphi 0, %s73
      %s91 = sphi 0, %s91
      %s93 = sphi 0, %s91
      %s94 = sphi 0, %s93
      %s108 = sphi 0, %s94
      %s112 = sphi 0, %s112
      %s114 = sphi 0, %s112
      %s115 = sphi 0, %s114
      %s129 = sphi 0, %s115
      %s133 = sphi 0, %s133
      %s135 = sphi 0, %s133
      %s136 = sphi 0, %s135
      %s150 = sphi 0, %s136
      %s154 = sphi 0, %s154
      %s156 = sphi 0, %s154
      %s157 = sphi 0, %s156
      %s171 = sphi 0, %s157
      %s175 = sphi 0, %s175
      %s177 = sphi 0, %s175
      %s178 = sphi 0, %s177
      %s192 = sphi 0, %s178
      %s196 = sphi 0, %s196
      %s198 = sphi 0, %s196
      %s199 = sphi 0, %s198
      %s213 = sphi 0, %s199
      %s219 = sphi 0, %s221
      %s222 = sphi 0, %s219
      %s223 = sphi 0, %s222
      %s239 = sphi 0, %s223
    $region4: #{tpu_custom_call.1} parent=1 // loop_header_branch
      %18 = sbr.rel (%p16) target = $region8
    $region5: #{tpu_custom_call.1} parent=1 // loop_body
      %s20 = ssub.s32 %s15, 1
      %s21 = ssub.s32 %s15, 2
      %s22 = sadd.s32 %s15, 1
      %s23 = ssub.s32 %s15, %s22
      %p24 = scmp.eq.s32.totalorder %s23, 0
      %s26 = sadd.s32 %s25, 1
      %s27 = scalar_select %p24, %s25, %s26
      %p30 = pneg %p24
      %p31 = scmp.eq.s32.totalorder %s15, 1
      %p32 = por %p30, %p31
      %p33 = scmp.ne.s32.totalorder %s25, %s28
      %p34 = scmp.eq.s32.totalorder %s15, 0
      %p35 = por %p33, %p34
      %p36 = scmp.ne.s32.totalorder %s25, %s28
      %p37 = scmp.eq.s32.totalorder %s20, 1
      %p38 = por %p36, %p37
      %p39 = scmp.ne.s32.totalorder %s28, %s29
      %p40 = scmp.eq.s32.totalorder %s20, 0
      %p41 = por %p39, %p40
      %p42 = scmp.ne.s32.totalorder %s28, %s29
      %p43 = scmp.eq.s32.totalorder %s21, 1
      %p44 = por %p42, %p43
      %p46 = scmp.ne.s32.totalorder %s29, %s45
      %p47 = scmp.eq.s32.totalorder %s21, 0
      %p48 = por %p46, %p47
      %s50 = sadd.s32 %s49, 1
      %p53 = scmp.eq.s32.totalorder %s15, 1
      %p54 = scmp.ne.s32.totalorder %s49, %s51
      %p55 = scmp.eq.s32.totalorder %s15, 0
      %p56 = por %p54, %p55
      %p57 = scmp.ne.s32.totalorder %s49, %s51
      %p58 = scmp.eq.s32.totalorder %s20, 1
      %p59 = por %p57, %p58
      %p60 = scmp.ne.s32.totalorder %s51, %s52
      %p61 = scmp.eq.s32.totalorder %s20, 0
      %p62 = por %p60, %p61
      %p63 = scmp.ne.s32.totalorder %s51, %s52
      %p64 = scmp.eq.s32.totalorder %s21, 1
      %p65 = por %p63, %p64
      %p67 = scmp.ne.s32.totalorder %s52, %s66
      %p68 = scmp.eq.s32.totalorder %s21, 0
      %p69 = por %p67, %p68
      %s71 = sadd.s32 %s70, 1
      %p74 = scmp.eq.s32.totalorder %s15, 1
      %p75 = scmp.ne.s32.totalorder %s70, %s72
      %p76 = scmp.eq.s32.totalorder %s15, 0
      %p77 = por %p75, %p76
      %p78 = scmp.ne.s32.totalorder %s70, %s72
      %p79 = scmp.eq.s32.totalorder %s20, 1
      %p80 = por %p78, %p79
      %p81 = scmp.ne.s32.totalorder %s72, %s73
      %p82 = scmp.eq.s32.totalorder %s20, 0
      %p83 = por %p81, %p82
      %p84 = scmp.ne.s32.totalorder %s72, %s73
      %p85 = scmp.eq.s32.totalorder %s21, 1
      %p86 = por %p84, %p85
      %p88 = scmp.ne.s32.totalorder %s73, %s87
      %p89 = scmp.eq.s32.totalorder %s21, 0
      %p90 = por %p88, %p89
      %s92 = sadd.s32 %s91, 1
      %p95 = scmp.eq.s32.totalorder %s15, 1
      %p96 = scmp.ne.s32.totalorder %s91, %s93
      %p97 = scmp.eq.s32.totalorder %s15, 0
      %p98 = por %p96, %p97
      %p99 = scmp.ne.s32.totalorder %s91, %s93
      %p100 = scmp.eq.s32.totalorder %s20, 1
      %p101 = por %p99, %p100
      %p102 = scmp.ne.s32.totalorder %s93, %s94
      %p103 = scmp.eq.s32.totalorder %s20, 0
      %p104 = por %p102, %p103
      %p105 = scmp.ne.s32.totalorder %s93, %s94
      %p106 = scmp.eq.s32.totalorder %s21, 1
      %p107 = por %p105, %p106
      %p109 = scmp.ne.s32.totalorder %s94, %s108
      %p110 = scmp.eq.s32.totalorder %s21, 0
      %p111 = por %p109, %p110
      %s113 = sadd.s32 %s112, 1
      %p116 = scmp.eq.s32.totalorder %s15, 1
      %p117 = scmp.ne.s32.totalorder %s112, %s114
      %p118 = scmp.eq.s32.totalorder %s15, 0
      %p119 = por %p117, %p118
      %p120 = scmp.ne.s32.totalorder %s112, %s114
      %p121 = scmp.eq.s32.totalorder %s20, 1
      %p122 = por %p120, %p121
      %p123 = scmp.ne.s32.totalorder %s114, %s115
      %p124 = scmp.eq.s32.totalorder %s20, 0
      %p125 = por %p123, %p124
      %p126 = scmp.ne.s32.totalorder %s114, %s115
      %p127 = scmp.eq.s32.totalorder %s21, 1
      %p128 = por %p126, %p127
      %p130 = scmp.ne.s32.totalorder %s115, %s129
      %p131 = scmp.eq.s32.totalorder %s21, 0
      %p132 = por %p130, %p131
      %s134 = sadd.s32 %s133, 1
      %p137 = scmp.eq.s32.totalorder %s15, 1
      %p138 = scmp.ne.s32.totalorder %s133, %s135
      %p139 = scmp.eq.s32.totalorder %s15, 0
      %p140 = por %p138, %p139
      %p141 = scmp.ne.s32.totalorder %s133, %s135
      %p142 = scmp.eq.s32.totalorder %s20, 1
      %p143 = por %p141, %p142
      %p144 = scmp.ne.s32.totalorder %s135, %s136
      %p145 = scmp.eq.s32.totalorder %s20, 0
      %p146 = por %p144, %p145
      %p147 = scmp.ne.s32.totalorder %s135, %s136
      %p148 = scmp.eq.s32.totalorder %s21, 1
      %p149 = por %p147, %p148
      %p151 = scmp.ne.s32.totalorder %s136, %s150
      %p152 = scmp.eq.s32.totalorder %s21, 0
      %p153 = por %p151, %p152
      %s155 = sadd.s32 %s154, 1
      %p158 = scmp.eq.s32.totalorder %s15, 1
      %p159 = scmp.ne.s32.totalorder %s154, %s156
      %p160 = scmp.eq.s32.totalorder %s15, 0
      %p161 = por %p159, %p160
      %p162 = scmp.ne.s32.totalorder %s154, %s156
      %p163 = scmp.eq.s32.totalorder %s20, 1
      %p164 = por %p162, %p163
      %p165 = scmp.ne.s32.totalorder %s156, %s157
      %p166 = scmp.eq.s32.totalorder %s20, 0
      %p167 = por %p165, %p166
      %p168 = scmp.ne.s32.totalorder %s156, %s157
      %p169 = scmp.eq.s32.totalorder %s21, 1
      %p170 = por %p168, %p169
      %p172 = scmp.ne.s32.totalorder %s157, %s171
      %p173 = scmp.eq.s32.totalorder %s21, 0
      %p174 = por %p172, %p173
      %s176 = sadd.s32 %s175, 1
      %p179 = scmp.eq.s32.totalorder %s15, 1
      %p180 = scmp.ne.s32.totalorder %s175, %s177
      %p181 = scmp.eq.s32.totalorder %s15, 0
      %p182 = por %p180, %p181
      %p183 = scmp.ne.s32.totalorder %s175, %s177
      %p184 = scmp.eq.s32.totalorder %s20, 1
      %p185 = por %p183, %p184
      %p186 = scmp.ne.s32.totalorder %s177, %s178
      %p187 = scmp.eq.s32.totalorder %s20, 0
      %p188 = por %p186, %p187
      %p189 = scmp.ne.s32.totalorder %s177, %s178
      %p190 = scmp.eq.s32.totalorder %s21, 1
      %p191 = por %p189, %p190
      %p193 = scmp.ne.s32.totalorder %s178, %s192
      %p194 = scmp.eq.s32.totalorder %s21, 0
      %p195 = por %p193, %p194
      %s197 = sadd.s32 %s196, 1
      %p200 = scmp.eq.s32.totalorder %s15, 1
      %p201 = scmp.ne.s32.totalorder %s196, %s198
      %p202 = scmp.eq.s32.totalorder %s15, 0
      %p203 = por %p201, %p202
      %p204 = scmp.ne.s32.totalorder %s196, %s198
      %p205 = scmp.eq.s32.totalorder %s20, 1
      %p206 = por %p204, %p205
      %p207 = scmp.ne.s32.totalorder %s198, %s199
      %p208 = scmp.eq.s32.totalorder %s20, 0
      %p209 = por %p207, %p208
      %p210 = scmp.ne.s32.totalorder %s198, %s199
      %p211 = scmp.eq.s32.totalorder %s21, 1
      %p212 = por %p210, %p211
      %p214 = scmp.ne.s32.totalorder %s199, %s213
      %p215 = scmp.eq.s32.totalorder %s21, 0
      %p216 = por %p214, %p215
      %s217 = ssub.s32 %s15, %s22
      %p218 = scmp.eq.s32.totalorder %s217, 0
      %s220 = sadd.s32 %s219, 1
      %s221 = scalar_select %p218, %s219, %s220
      %p224 = pneg %p218
      %p225 = scmp.eq.s32.totalorder %s15, 1
      %p226 = por %p224, %p225
      %p227 = scmp.ne.s32.totalorder %s219, %s222
      %p228 = scmp.eq.s32.totalorder %s15, 0
      %p229 = por %p227, %p228
      %p230 = scmp.ne.s32.totalorder %s219, %s222
      %p231 = scmp.eq.s32.totalorder %s20, 1
      %p232 = por %p230, %p231
      %p233 = scmp.ne.s32.totalorder %s222, %s223
      %p234 = scmp.eq.s32.totalorder %s20, 0
      %p235 = por %p233, %p234
      %p236 = scmp.ne.s32.totalorder %s222, %s223
      %p237 = scmp.eq.s32.totalorder %s21, 1
      %p238 = por %p236, %p237
      %p240 = scmp.ne.s32.totalorder %s223, %s239
      %p241 = scmp.eq.s32.totalorder %s21, 0
      %p242 = por %p240, %p241
      %p243 = scmp.le.s32.totalorder 1, %s15
      %p244 = scmp.lt.s32.totalorder %s15, 3
      %p245 = pnand %p243, %p244
      %p246 = pneg %p245
      // Predicated region
      $region9: #{tpu_custom_call.1} parent=5 // pred_check
        _
      $region10: #{tpu_custom_call.1} parent=5 // pred_check_branch
        %248 = sbr.rel (%p245) target = $region12
      $region11: #{tpu_custom_call.1} parent=5 // pred_region
        %s249 = ssub.s32 %s15, 1
        // Predicated region
        $region13: #{tpu_custom_call.1} parent=11 // pred_check
          %p250 = pneg %p62
        $region14: #{tpu_custom_call.1} parent=11 // pred_check_branch
          %252 = sbr.rel (%p250) target = $region16
        $region15: #{tpu_custom_call.1} parent=11 // pred_region
          _
        $region16: #{tpu_custom_call.1} parent=11 // pred_fallthru
          _
        // Predicated region
        $region17: #{tpu_custom_call.1} parent=11 // pred_check
          %p253 = pneg %p83
        $region18: #{tpu_custom_call.1} parent=11 // pred_check_branch
          %255 = sbr.rel (%p253) target = $region20
        $region19: #{tpu_custom_call.1} parent=11 // pred_region
          _
        $region20: #{tpu_custom_call.1} parent=11 // pred_fallthru
          _
        // Predicated region
        $region21: #{tpu_custom_call.1} parent=11 // pred_check
          %p256 = pneg %p104
        $region22: #{tpu_custom_call.1} parent=11 // pred_check_branch
          %258 = sbr.rel (%p256) target = $region24
        $region23: #{tpu_custom_call.1} parent=11 // pred_region
          _
        $region24: #{tpu_custom_call.1} parent=11 // pred_fallthru
          _
        // Predicated region
        $region25: #{tpu_custom_call.1} parent=11 // pred_check
          %p259 = pneg %p125
        $region26: #{tpu_custom_call.1} parent=11 // pred_check_branch
          %261 = sbr.rel (%p259) target = $region28
        $region27: #{tpu_custom_call.1} parent=11 // pred_region
          _
        $region28: #{tpu_custom_call.1} parent=11 // pred_fallthru
          _
        // Predicated region
        $region29: #{tpu_custom_call.1} parent=11 // pred_check
          %p262 = pneg %p146
        $region30: #{tpu_custom_call.1} parent=11 // pred_check_branch
          %264 = sbr.rel (%p262) target = $region32
        $region31: #{tpu_custom_call.1} parent=11 // pred_region
          _
        $region32: #{tpu_custom_call.1} parent=11 // pred_fallthru
          _
        // Predicated region
        $region33: #{tpu_custom_call.1} parent=11 // pred_check
          %p265 = pneg %p167
        $region34: #{tpu_custom_call.1} parent=11 // pred_check_branch
          %267 = sbr.rel (%p265) target = $region36
        $region35: #{tpu_custom_call.1} parent=11 // pred_region
          _
        $region36: #{tpu_custom_call.1} parent=11 // pred_fallthru
          _
        // Predicated region
        $region37: #{tpu_custom_call.1} parent=11 // pred_check
          %p268 = pneg %p188
        $region38: #{tpu_custom_call.1} parent=11 // pred_check_branch
          %270 = sbr.rel (%p268) target = $region40
        $region39: #{tpu_custom_call.1} parent=11 // pred_region
          _
        $region40: #{tpu_custom_call.1} parent=11 // pred_fallthru
          _
        // Predicated region
        $region41: #{tpu_custom_call.1} parent=11 // pred_check
          %p271 = pneg %p209
        $region42: #{tpu_custom_call.1} parent=11 // pred_check_branch
          %273 = sbr.rel (%p271) target = $region44
        $region43: #{tpu_custom_call.1} parent=11 // pred_region
          _
        $region44: #{tpu_custom_call.1} parent=11 // pred_fallthru
          _
      $region12: #{tpu_custom_call.1} parent=5 // pred_fallthru
        _
      %p274 = scmp.lt.s32.totalorder %s15, 2
      // Predicated region
      $region45: #{tpu_custom_call.1} parent=5 // pred_check
        %p275 = pneg %p274
      $region46: #{tpu_custom_call.1} parent=5 // pred_check_branch
        %277 = sbr.rel (%p275) target = $region48
      $region47: #{tpu_custom_call.1} parent=5 // pred_region
        // Predicated region
        $region49: #{tpu_custom_call.1} parent=47 // pred_check
          %p278 = pneg %p35
        $region50: #{tpu_custom_call.1} parent=47 // pred_check_branch
          %280 = sbr.rel (%p278) target = $region52
        $region51: #{tpu_custom_call.1} parent=47 // pred_region
          %s281 = smul.u32 32, %s15
          %s282 = ssub.s32 38, %s281
          %p283 = scmp.lt.s32.totalorder %s282, 32
          %s284 = scalar_select %p283, %s282, 32
          %s285 = smul.u32 8, %s284
          %p286 = scmp.lt.s32.totalorder %s281, 37
          %s287 = scalar_select %p286, %s281, 37
          %s288 = smul.addr %s287, 8
          %s289 = scalar_lea.vmem %s0, %s288
          %s290 = smul.u32 32, %s15
          %s291 = ssub.s32 38, %s290
          %p292 = scmp.lt.s32.totalorder %s291, 32
          %s293 = scalar_select %p292, %s291, 32
          %s294 = smul.u32 8, %s293
        $region52: #{tpu_custom_call.1} parent=47 // pred_fallthru
          _
      $region48: #{tpu_custom_call.1} parent=5 // pred_fallthru
        _
      %p295 = scmp.le.s32.totalorder 1, %s15
      %p296 = scmp.lt.s32.totalorder %s15, 3
      %p297 = pnand %p295, %p296
      %p298 = pneg %p297
      // Predicated region
      $region53: #{tpu_custom_call.1} parent=5 // pred_check
        _
      $region54: #{tpu_custom_call.1} parent=5 // pred_check_branch
        %300 = sbr.rel (%p297) target = $region56
      $region55: #{tpu_custom_call.1} parent=5 // pred_region
        %s301 = ssub.s32 %s15, 1
        %s302 = smul.u32 32, %s20
        %s303 = ssub.s32 38, %s302
        %p304 = scmp.lt.s32.totalorder %s303, 32
        %s305 = scalar_select %p304, %s303, 32
        %s306 = smul.u32 8, %s305
        %p307 = scmp.lt.s32.totalorder %s302, 37
        %s308 = scalar_select %p307, %s302, 37
        %s309 = smul.addr %s308, 8
        %s310 = scalar_lea.vmem %s0, %s309
        %p311 = pneg %p41
        %p312 = pneg %p38
        %p313 = pneg %p62
        %p314 = pneg %p59
        %p315 = pneg %p83
        %p316 = pneg %p80
        %p317 = pneg %p104
        %p318 = pneg %p101
        %p319 = pneg %p125
        %p320 = pneg %p122
        %p321 = pneg %p146
        %p322 = pneg %p143
        %p323 = pneg %p167
        %p324 = pneg %p164
        %p325 = pneg %p188
        %p326 = pneg %p185
        %p327 = pneg %p209
        %p328 = pneg %p206
        %p329 = pneg %p235
        %p330 = pneg %p232
        %s331 = sand.u32 %s222, 1
        %s332 = sand.u32 %s222, 1
        %s333 = smul.addr %s332, 256
        %s334 = scalar_lea.vmem [#allocation2], %s333
        %s335 = smul.u32 32, %s20
        %s336 = ssub.s32 38, %s335
        %p337 = scmp.lt.s32.totalorder %s336, 32
        %s338 = scalar_select %p337, %s336, 32
        %s339 = smul.u32 8, %s338
        %p340 = scmp.lt.s32.totalorder %s335, 37
        %s341 = scalar_select %p340, %s335, 37
        %s342 = smul.addr %s341, 8
        %s343 = scalar_lea.vmem %s0, %s342
        %s344 = smul.u32 32, %s20
        %s345 = ssub.s32 38, %s344
        %p346 = scmp.lt.s32.totalorder %s345, 32
        %s347 = scalar_select %p346, %s345, 32
        %s348 = smul.u32 8, %s347
        %s349 = smul.u32 32, %s20
        %s350 = ssub.s32 38, %s349
        %p351 = scmp.lt.s32.totalorder %s350, 32
        %s352 = scalar_select %p351, %s350, 32
        %s353 = smul.u32 8, %s352
        %v354 = vld [vmem:[%s343] sm:$0xff]
        %v355 = vld [vmem:[%s343 + $0x8] sm:$0xff]
        %v356 = vld [vmem:[%s343 + $0x10] sm:$0xff]
        %v357 = vld [vmem:[%s343 + $0x18] sm:$0xff]
        %v358 = vld [vmem:[%s343 + $0x20] sm:$0xff]
        %v359 = vld [vmem:[%s343 + $0x28] sm:$0xff]
        %v360 = vld [vmem:[%s343 + $0x30] sm:$0xff]
        %v361 = vld [vmem:[%s343 + $0x38] sm:$0xff]
        %v362 = vld [vmem:[%s343 + $0x40] sm:$0xff]
        %v363 = vld [vmem:[%s343 + $0x48] sm:$0xff]
        %v364 = vld [vmem:[%s343 + $0x50] sm:$0xff]
        %v365 = vld [vmem:[%s343 + $0x58] sm:$0xff]
        %v366 = vld [vmem:[%s343 + $0x60] sm:$0xff]
        %v367 = vld [vmem:[%s343 + $0x68] sm:$0xff]
        %v368 = vld [vmem:[%s343 + $0x70] sm:$0xff]
        %v369 = vld [vmem:[%s343 + $0x78] sm:$0xff]
        %v370 = vld [vmem:[%s343 + $0x80] sm:$0xff]
        %v371 = vld [vmem:[%s343 + $0x88] sm:$0xff]
        %v372 = vld [vmem:[%s343 + $0x90] sm:$0xff]
        %v373 = vld [vmem:[%s343 + $0x98] sm:$0xff]
        %v374 = vld [vmem:[%s343 + $0xa0] sm:$0xff]
        %v375 = vld [vmem:[%s343 + $0xa8] sm:$0xff]
        %v376 = vld [vmem:[%s343 + $0xb0] sm:$0xff]
        %v377 = vld [vmem:[%s343 + $0xb8] sm:$0xff]
        %v378 = vld [vmem:[%s343 + $0xc0] sm:$0xff]
        %v379 = vld [vmem:[%s343 + $0xc8] sm:$0xff]
        %v380 = vld [vmem:[%s343 + $0xd0] sm:$0xff]
        %v381 = vld [vmem:[%s343 + $0xd8] sm:$0xff]
        %v382 = vld [vmem:[%s343 + $0xe0] sm:$0xff]
        %v383 = vld [vmem:[%s343 + $0xe8] sm:$0xff]
        %v384 = vld [vmem:[%s343 + $0xf0] sm:$0xff]
        %v385 = vld [vmem:[%s343 + $0xf8] sm:$0xff]
        %v386 = vld [vmem:[%s1] sm:$0xff]
        %v387 = vld [vmem:[%s1 + $0x8] sm:$0x3]
        %v388 = vld [vmem:[%s2] sm:$0x1]
        %v390 = vperm.slane %v388, 0
        %vm392 = vcmask 80896
        %v394 = vsel %vm392, %v354, 0
        %v397 = vsel %vm392, %v355, 0
        %v400 = vsel %vm392, %v356, 0
        %v403 = vsel %vm392, %v357, 0
        %v406 = vsel %vm392, %v358, 0
        %v409 = vsel %vm392, %v359, 0
        %v412 = vsel %vm392, %v360, 0
        %v415 = vsel %vm392, %v361, 0
        %v418 = vsel %vm392, %v362, 0
        %v421 = vsel %vm392, %v363, 0
        %v424 = vsel %vm392, %v364, 0
        %v427 = vsel %vm392, %v365, 0
        %v430 = vsel %vm392, %v366, 0
        %v433 = vsel %vm392, %v367, 0
        %v436 = vsel %vm392, %v368, 0
        %v439 = vsel %vm392, %v369, 0
        %v442 = vsel %vm392, %v370, 0
        %v445 = vsel %vm392, %v371, 0
        %v448 = vsel %vm392, %v372, 0
        %v451 = vsel %vm392, %v373, 0
        %v454 = vsel %vm392, %v374, 0
        %v457 = vsel %vm392, %v375, 0
        %v460 = vsel %vm392, %v376, 0
        %v463 = vsel %vm392, %v377, 0
        %v466 = vsel %vm392, %v378, 0
        %v469 = vsel %vm392, %v379, 0
        %v472 = vsel %vm392, %v380, 0
        %v475 = vsel %vm392, %v381, 0
        %v478 = vsel %vm392, %v382, 0
        %v481 = vsel %vm392, %v383, 0
        %v484 = vsel %vm392, %v384, 0
        %v487 = vsel %vm392, %v385, 0
        %vm489 = vcmask 1041408
        %v491 = vsel %vm489, %v387, 0
        %493 = vmatpush.msra.mxu0 0.0
        %494 = vmatpush.msra.mxu0 0.0
        %495 = vmatpush.msra.mxu0 0.0
        %496 = vmatpush.msra.mxu0 0.0
        %497 = vmatpush.msra.mxu0 0.0
        %498 = vmatpush.msra.mxu0 0.0
        %499 = vmatpush.msra.mxu0 0.0
        %500 = vmatpush.msra.mxu0 0.0
        %501 = vmatpush.msra.mxu0 0.0
        %502 = vmatpush.msra.mxu0 0.0
        %503 = vmatpush.msra.mxu0 0.0
        %504 = vmatpush.msra.mxu0 0.0
        %505 = vmatpush.msra.mxu0 0.0
        %506 = vmatpush.msra.mxu0 0.0
        %507 = vmatpush.msra.mxu0 %v491
        %508 = vmatpush.msra.mxu0 %v386
        %509 = vmatmul.f32.gmra.mxu0 %v394
        %v510 = vpop.f32.mrf.mxu0
        %v511 = vadd.f32 %v390, %v510
        %512 = vmatmul.f32.gmra.mxu0 %v397
        %v513 = vpop.f32.mrf.mxu0
        %v514 = vadd.f32 %v390, %v513
        %515 = vmatmul.f32.gmra.mxu0 %v400
        %v516 = vpop.f32.mrf.mxu0
        %v517 = vadd.f32 %v390, %v516
        %518 = vmatmul.f32.gmra.mxu0 %v403
        %v519 = vpop.f32.mrf.mxu0
        %v520 = vadd.f32 %v390, %v519
        %521 = vmatmul.f32.gmra.mxu0 %v406
        %v522 = vpop.f32.mrf.mxu0
        %v523 = vadd.f32 %v390, %v522
        %524 = vmatmul.f32.gmra.mxu0 %v409
        %v525 = vpop.f32.mrf.mxu0
        %v526 = vadd.f32 %v390, %v525
        %527 = vmatmul.f32.gmra.mxu0 %v412
        %v528 = vpop.f32.mrf.mxu0
        %v529 = vadd.f32 %v390, %v528
        %530 = vmatmul.f32.gmra.mxu0 %v415
        %v531 = vpop.f32.mrf.mxu0
        %v532 = vadd.f32 %v390, %v531
        %533 = vmatmul.f32.gmra.mxu0 %v418
        %v534 = vpop.f32.mrf.mxu0
        %v535 = vadd.f32 %v390, %v534
        %536 = vmatmul.f32.gmra.mxu0 %v421
        %v537 = vpop.f32.mrf.mxu0
        %v538 = vadd.f32 %v390, %v537
        %539 = vmatmul.f32.gmra.mxu0 %v424
        %v540 = vpop.f32.mrf.mxu0
        %v541 = vadd.f32 %v390, %v540
        %542 = vmatmul.f32.gmra.mxu0 %v427
        %v543 = vpop.f32.mrf.mxu0
        %v544 = vadd.f32 %v390, %v543
        %545 = vmatmul.f32.gmra.mxu0 %v430
        %v546 = vpop.f32.mrf.mxu0
        %v547 = vadd.f32 %v390, %v546
        %548 = vmatmul.f32.gmra.mxu0 %v433
        %v549 = vpop.f32.mrf.mxu0
        %v550 = vadd.f32 %v390, %v549
        %551 = vmatmul.f32.gmra.mxu0 %v436
        %v552 = vpop.f32.mrf.mxu0
        %v553 = vadd.f32 %v390, %v552
        %554 = vmatmul.f32.gmra.mxu0 %v439
        %v555 = vpop.f32.mrf.mxu0
        %v556 = vadd.f32 %v390, %v555
        %557 = vmatmul.f32.gmra.mxu0 %v442
        %v558 = vpop.f32.mrf.mxu0
        %v559 = vadd.f32 %v390, %v558
        %560 = vmatmul.f32.gmra.mxu0 %v445
        %v561 = vpop.f32.mrf.mxu0
        %v562 = vadd.f32 %v390, %v561
        %563 = vmatmul.f32.gmra.mxu0 %v448
        %v564 = vpop.f32.mrf.mxu0
        %v565 = vadd.f32 %v390, %v564
        %566 = vmatmul.f32.gmra.mxu0 %v451
        %v567 = vpop.f32.mrf.mxu0
        %v568 = vadd.f32 %v390, %v567
        %569 = vmatmul.f32.gmra.mxu0 %v454
        %v570 = vpop.f32.mrf.mxu0
        %v571 = vadd.f32 %v390, %v570
        %572 = vmatmul.f32.gmra.mxu0 %v457
        %v573 = vpop.f32.mrf.mxu0
        %v574 = vadd.f32 %v390, %v573
        %575 = vmatmul.f32.gmra.mxu0 %v460
        %v576 = vpop.f32.mrf.mxu0
        %v577 = vadd.f32 %v390, %v576
        %578 = vmatmul.f32.gmra.mxu0 %v463
        %v579 = vpop.f32.mrf.mxu0
        %v580 = vadd.f32 %v390, %v579
        %581 = vmatmul.f32.gmra.mxu0 %v466
        %v582 = vpop.f32.mrf.mxu0
        %v583 = vadd.f32 %v390, %v582
        %584 = vmatmul.f32.gmra.mxu0 %v469
        %v585 = vpop.f32.mrf.mxu0
        %v586 = vadd.f32 %v390, %v585
        %587 = vmatmul.f32.gmra.mxu0 %v472
        %v588 = vpop.f32.mrf.mxu0
        %v589 = vadd.f32 %v390, %v588
        %590 = vmatmul.f32.gmra.mxu0 %v475
        %v591 = vpop.f32.mrf.mxu0
        %v592 = vadd.f32 %v390, %v591
        %593 = vmatmul.f32.gmra.mxu0 %v478
        %v594 = vpop.f32.mrf.mxu0
        %v595 = vadd.f32 %v390, %v594
        %596 = vmatmul.f32.gmra.mxu0 %v481
        %v597 = vpop.f32.mrf.mxu0
        %v598 = vadd.f32 %v390, %v597
        %599 = vmatmul.f32.gmra.mxu0 %v484
        %v600 = vpop.f32.mrf.mxu0
        %v601 = vadd.f32 %v390, %v600
        %602 = vmatmul.f32.gmra.mxu0 %v487
        %v603 = vpop.f32.mrf.mxu0
        %v604 = vadd.f32 %v390, %v603
        %605 = vdwg.mxu0
        %v606 = vmax.f32 %v511, 0.0
        %v607 = vmax.f32 %v514, 0.0
        %v608 = vmax.f32 %v517, 0.0
        %v609 = vmax.f32 %v520, 0.0
        %v610 = vmax.f32 %v523, 0.0
        %v611 = vmax.f32 %v526, 0.0
        %v612 = vmax.f32 %v529, 0.0
        %v613 = vmax.f32 %v532, 0.0
        %v614 = vmax.f32 %v535, 0.0
        %v615 = vmax.f32 %v538, 0.0
        %v616 = vmax.f32 %v541, 0.0
        %v617 = vmax.f32 %v544, 0.0
        %v618 = vmax.f32 %v547, 0.0
        %v619 = vmax.f32 %v550, 0.0
        %v620 = vmax.f32 %v553, 0.0
        %v621 = vmax.f32 %v556, 0.0
        %v622 = vmax.f32 %v559, 0.0
        %v623 = vmax.f32 %v562, 0.0
        %v624 = vmax.f32 %v565, 0.0
        %v625 = vmax.f32 %v568, 0.0
        %v626 = vmax.f32 %v571, 0.0
        %v627 = vmax.f32 %v574, 0.0
        %v628 = vmax.f32 %v577, 0.0
        %v629 = vmax.f32 %v580, 0.0
        %v630 = vmax.f32 %v583, 0.0
        %v631 = vmax.f32 %v586, 0.0
        %v632 = vmax.f32 %v589, 0.0
        %v633 = vmax.f32 %v592, 0.0
        %v634 = vmax.f32 %v595, 0.0
        %v635 = vmax.f32 %v598, 0.0
        %v636 = vmax.f32 %v601, 0.0
        %v637 = vmax.f32 %v604, 0.0
        %v638 = vld [vmem:[%s3] sm:$0xff]
        %v639 = vld [vmem:[%s3 + $0x8] sm:$0xff]
        %v640 = vld [vmem:[%s4] sm:$0x1]
        %v642 = vperm.slane %v640, 0
        %vm644 = vcmask 130048
        %v646 = vsel %vm644, %v606, 0
        %v649 = vsel %vm644, %v607, 0
        %v652 = vsel %vm644, %v608, 0
        %v655 = vsel %vm644, %v609, 0
        %v658 = vsel %vm644, %v610, 0
        %v661 = vsel %vm644, %v611, 0
        %v664 = vsel %vm644, %v612, 0
        %v667 = vsel %vm644, %v613, 0
        %v670 = vsel %vm644, %v614, 0
        %v673 = vsel %vm644, %v615, 0
        %v676 = vsel %vm644, %v616, 0
        %v679 = vsel %vm644, %v617, 0
        %v682 = vsel %vm644, %v618, 0
        %v685 = vsel %vm644, %v619, 0
        %v688 = vsel %vm644, %v620, 0
        %v691 = vsel %vm644, %v621, 0
        %v694 = vsel %vm644, %v622, 0
        %v697 = vsel %vm644, %v623, 0
        %v700 = vsel %vm644, %v624, 0
        %v703 = vsel %vm644, %v625, 0
        %v706 = vsel %vm644, %v626, 0
        %v709 = vsel %vm644, %v627, 0
        %v712 = vsel %vm644, %v628, 0
        %v715 = vsel %vm644, %v629, 0
        %v718 = vsel %vm644, %v630, 0
        %v721 = vsel %vm644, %v631, 0
        %v724 = vsel %vm644, %v632, 0
        %v727 = vsel %vm644, %v633, 0
        %v730 = vsel %vm644, %v634, 0
        %v733 = vsel %vm644, %v635, 0
        %v736 = vsel %vm644, %v636, 0
        %v739 = vsel %vm644, %v637, 0
        %741 = vmatpush.msra.mxu0 0.0
        %742 = vmatpush.msra.mxu0 0.0
        %743 = vmatpush.msra.mxu0 0.0
        %744 = vmatpush.msra.mxu0 0.0
        %745 = vmatpush.msra.mxu0 0.0
        %746 = vmatpush.msra.mxu0 0.0
        %747 = vmatpush.msra.mxu0 0.0
        %748 = vmatpush.msra.mxu0 0.0
        %749 = vmatpush.msra.mxu0 0.0
        %750 = vmatpush.msra.mxu0 0.0
        %751 = vmatpush.msra.mxu0 0.0
        %752 = vmatpush.msra.mxu0 0.0
        %753 = vmatpush.msra.mxu0 0.0
        %754 = vmatpush.msra.mxu0 0.0
        %755 = vmatpush.msra.mxu0 %v639
        %756 = vmatpush.msra.mxu0 %v638
        %757 = vmatmul.f32.gmra.mxu0 %v646
        %v758 = vpop.f32.mrf.mxu0
        %v759 = vadd.f32 %v642, %v758
        %760 = vmatmul.f32.gmra.mxu0 %v649
        %v761 = vpop.f32.mrf.mxu0
        %v762 = vadd.f32 %v642, %v761
        %763 = vmatmul.f32.gmra.mxu0 %v652
        %v764 = vpop.f32.mrf.mxu0
        %v765 = vadd.f32 %v642, %v764
        %766 = vmatmul.f32.gmra.mxu0 %v655
        %v767 = vpop.f32.mrf.mxu0
        %v768 = vadd.f32 %v642, %v767
        %769 = vmatmul.f32.gmra.mxu0 %v658
        %v770 = vpop.f32.mrf.mxu0
        %v771 = vadd.f32 %v642, %v770
        %772 = vmatmul.f32.gmra.mxu0 %v661
        %v773 = vpop.f32.mrf.mxu0
        %v774 = vadd.f32 %v642, %v773
        %775 = vmatmul.f32.gmra.mxu0 %v664
        %v776 = vpop.f32.mrf.mxu0
        %v777 = vadd.f32 %v642, %v776
        %778 = vmatmul.f32.gmra.mxu0 %v667
        %v779 = vpop.f32.mrf.mxu0
        %v780 = vadd.f32 %v642, %v779
        %781 = vmatmul.f32.gmra.mxu0 %v670
        %v782 = vpop.f32.mrf.mxu0
        %v783 = vadd.f32 %v642, %v782
        %784 = vmatmul.f32.gmra.mxu0 %v673
        %v785 = vpop.f32.mrf.mxu0
        %v786 = vadd.f32 %v642, %v785
        %787 = vmatmul.f32.gmra.mxu0 %v676
        %v788 = vpop.f32.mrf.mxu0
        %v789 = vadd.f32 %v642, %v788
        %790 = vmatmul.f32.gmra.mxu0 %v679
        %v791 = vpop.f32.mrf.mxu0
        %v792 = vadd.f32 %v642, %v791
        %793 = vmatmul.f32.gmra.mxu0 %v682
        %v794 = vpop.f32.mrf.mxu0
        %v795 = vadd.f32 %v642, %v794
        %796 = vmatmul.f32.gmra.mxu0 %v685
        %v797 = vpop.f32.mrf.mxu0
        %v798 = vadd.f32 %v642, %v797
        %799 = vmatmul.f32.gmra.mxu0 %v688
        %v800 = vpop.f32.mrf.mxu0
        %v801 = vadd.f32 %v642, %v800
        %802 = vmatmul.f32.gmra.mxu0 %v691
        %v803 = vpop.f32.mrf.mxu0
        %v804 = vadd.f32 %v642, %v803
        %805 = vmatmul.f32.gmra.mxu0 %v694
        %v806 = vpop.f32.mrf.mxu0
        %v807 = vadd.f32 %v642, %v806
        %808 = vmatmul.f32.gmra.mxu0 %v697
        %v809 = vpop.f32.mrf.mxu0
        %v810 = vadd.f32 %v642, %v809
        %811 = vmatmul.f32.gmra.mxu0 %v700
        %v812 = vpop.f32.mrf.mxu0
        %v813 = vadd.f32 %v642, %v812
        %814 = vmatmul.f32.gmra.mxu0 %v703
        %v815 = vpop.f32.mrf.mxu0
        %v816 = vadd.f32 %v642, %v815
        %817 = vmatmul.f32.gmra.mxu0 %v706
        %v818 = vpop.f32.mrf.mxu0
        %v819 = vadd.f32 %v642, %v818
        %820 = vmatmul.f32.gmra.mxu0 %v709
        %v821 = vpop.f32.mrf.mxu0
        %v822 = vadd.f32 %v642, %v821
        %823 = vmatmul.f32.gmra.mxu0 %v712
        %v824 = vpop.f32.mrf.mxu0
        %v825 = vadd.f32 %v642, %v824
        %826 = vmatmul.f32.gmra.mxu0 %v715
        %v827 = vpop.f32.mrf.mxu0
        %v828 = vadd.f32 %v642, %v827
        %829 = vmatmul.f32.gmra.mxu0 %v718
        %v830 = vpop.f32.mrf.mxu0
        %v831 = vadd.f32 %v642, %v830
        %832 = vmatmul.f32.gmra.mxu0 %v721
        %v833 = vpop.f32.mrf.mxu0
        %v834 = vadd.f32 %v642, %v833
        %835 = vmatmul.f32.gmra.mxu0 %v724
        %v836 = vpop.f32.mrf.mxu0
        %v837 = vadd.f32 %v642, %v836
        %838 = vmatmul.f32.gmra.mxu0 %v727
        %v839 = vpop.f32.mrf.mxu0
        %v840 = vadd.f32 %v642, %v839
        %841 = vmatmul.f32.gmra.mxu0 %v730
        %v842 = vpop.f32.mrf.mxu0
        %v843 = vadd.f32 %v642, %v842
        %844 = vmatmul.f32.gmra.mxu0 %v733
        %v845 = vpop.f32.mrf.mxu0
        %v846 = vadd.f32 %v642, %v845
        %847 = vmatmul.f32.gmra.mxu0 %v736
        %v848 = vpop.f32.mrf.mxu0
        %v849 = vadd.f32 %v642, %v848
        %850 = vmatmul.f32.gmra.mxu0 %v739
        %v851 = vpop.f32.mrf.mxu0
        %v852 = vadd.f32 %v642, %v851
        %853 = vdwg.mxu0
        %v854 = vmax.f32 %v759, 0.0
        %v855 = vmax.f32 %v762, 0.0
        %v856 = vmax.f32 %v765, 0.0
        %v857 = vmax.f32 %v768, 0.0
        %v858 = vmax.f32 %v771, 0.0
        %v859 = vmax.f32 %v774, 0.0
        %v860 = vmax.f32 %v777, 0.0
        %v861 = vmax.f32 %v780, 0.0
        %v862 = vmax.f32 %v783, 0.0
        %v863 = vmax.f32 %v786, 0.0
        %v864 = vmax.f32 %v789, 0.0
        %v865 = vmax.f32 %v792, 0.0
        %v866 = vmax.f32 %v795, 0.0
        %v867 = vmax.f32 %v798, 0.0
        %v868 = vmax.f32 %v801, 0.0
        %v869 = vmax.f32 %v804, 0.0
        %v870 = vmax.f32 %v807, 0.0
        %v871 = vmax.f32 %v810, 0.0
        %v872 = vmax.f32 %v813, 0.0
        %v873 = vmax.f32 %v816, 0.0
        %v874 = vmax.f32 %v819, 0.0
        %v875 = vmax.f32 %v822, 0.0
        %v876 = vmax.f32 %v825, 0.0
        %v877 = vmax.f32 %v828, 0.0
        %v878 = vmax.f32 %v831, 0.0
        %v879 = vmax.f32 %v834, 0.0
        %v880 = vmax.f32 %v837, 0.0
        %v881 = vmax.f32 %v840, 0.0
        %v882 = vmax.f32 %v843, 0.0
        %v883 = vmax.f32 %v846, 0.0
        %v884 = vmax.f32 %v849, 0.0
        %v885 = vmax.f32 %v852, 0.0
        %v886 = vld [vmem:[%s5] sm:$0xff]
        %v887 = vld [vmem:[%s6] sm:$0x1]
        %v889 = vperm.slane %v887, 0
        %vm891 = vcmask 64512
        %v893 = vsel %vm891, %v854, 0
        %v896 = vsel %vm891, %v855, 0
        %v899 = vsel %vm891, %v856, 0
        %v902 = vsel %vm891, %v857, 0
        %v905 = vsel %vm891, %v858, 0
        %v908 = vsel %vm891, %v859, 0
        %v911 = vsel %vm891, %v860, 0
        %v914 = vsel %vm891, %v861, 0
        %v917 = vsel %vm891, %v862, 0
        %v920 = vsel %vm891, %v863, 0
        %v923 = vsel %vm891, %v864, 0
        %v926 = vsel %vm891, %v865, 0
        %v929 = vsel %vm891, %v866, 0
        %v932 = vsel %vm891, %v867, 0
        %v935 = vsel %vm891, %v868, 0
        %v938 = vsel %vm891, %v869, 0
        %v941 = vsel %vm891, %v870, 0
        %v944 = vsel %vm891, %v871, 0
        %v947 = vsel %vm891, %v872, 0
        %v950 = vsel %vm891, %v873, 0
        %v953 = vsel %vm891, %v874, 0
        %v956 = vsel %vm891, %v875, 0
        %v959 = vsel %vm891, %v876, 0
        %v962 = vsel %vm891, %v877, 0
        %v965 = vsel %vm891, %v878, 0
        %v968 = vsel %vm891, %v879, 0
        %v971 = vsel %vm891, %v880, 0
        %v974 = vsel %vm891, %v881, 0
        %v977 = vsel %vm891, %v882, 0
        %v980 = vsel %vm891, %v883, 0
        %v983 = vsel %vm891, %v884, 0
        %v986 = vsel %vm891, %v885, 0
        %988 = vmatpush.msra.mxu0 0.0
        %989 = vmatpush.msra.mxu0 0.0
        %990 = vmatpush.msra.mxu0 0.0
        %991 = vmatpush.msra.mxu0 0.0
        %992 = vmatpush.msra.mxu0 0.0
        %993 = vmatpush.msra.mxu0 0.0
        %994 = vmatpush.msra.mxu0 0.0
        %995 = vmatpush.msra.mxu0 0.0
        %996 = vmatpush.msra.mxu0 0.0
        %997 = vmatpush.msra.mxu0 0.0
        %998 = vmatpush.msra.mxu0 0.0
        %999 = vmatpush.msra.mxu0 0.0
        %1000 = vmatpush.msra.mxu0 0.0
        %1001 = vmatpush.msra.mxu0 0.0
        %1002 = vmatpush.msra.mxu0 0.0
        %1003 = vmatpush.msra.mxu0 %v886
        %1004 = vmatmul.f32.gmra.mxu0 %v893
        %v1005 = vpop.f32.mrf.mxu0
        %v1006 = vadd.f32 %v889, %v1005
        %1007 = vmatmul.f32.gmra.mxu0 %v896
        %v1008 = vpop.f32.mrf.mxu0
        %v1009 = vadd.f32 %v889, %v1008
        %1010 = vmatmul.f32.gmra.mxu0 %v899
        %v1011 = vpop.f32.mrf.mxu0
        %v1012 = vadd.f32 %v889, %v1011
        %1013 = vmatmul.f32.gmra.mxu0 %v902
        %v1014 = vpop.f32.mrf.mxu0
        %v1015 = vadd.f32 %v889, %v1014
        %1016 = vmatmul.f32.gmra.mxu0 %v905
        %v1017 = vpop.f32.mrf.mxu0
        %v1018 = vadd.f32 %v889, %v1017
        %1019 = vmatmul.f32.gmra.mxu0 %v908
        %v1020 = vpop.f32.mrf.mxu0
        %v1021 = vadd.f32 %v889, %v1020
        %1022 = vmatmul.f32.gmra.mxu0 %v911
        %v1023 = vpop.f32.mrf.mxu0
        %v1024 = vadd.f32 %v889, %v1023
        %1025 = vmatmul.f32.gmra.mxu0 %v914
        %v1026 = vpop.f32.mrf.mxu0
        %v1027 = vadd.f32 %v889, %v1026
        %1028 = vmatmul.f32.gmra.mxu0 %v917
        %v1029 = vpop.f32.mrf.mxu0
        %v1030 = vadd.f32 %v889, %v1029
        %1031 = vmatmul.f32.gmra.mxu0 %v920
        %v1032 = vpop.f32.mrf.mxu0
        %v1033 = vadd.f32 %v889, %v1032
        %1034 = vmatmul.f32.gmra.mxu0 %v923
        %v1035 = vpop.f32.mrf.mxu0
        %v1036 = vadd.f32 %v889, %v1035
        %1037 = vmatmul.f32.gmra.mxu0 %v926
        %v1038 = vpop.f32.mrf.mxu0
        %v1039 = vadd.f32 %v889, %v1038
        %1040 = vmatmul.f32.gmra.mxu0 %v929
        %v1041 = vpop.f32.mrf.mxu0
        %v1042 = vadd.f32 %v889, %v1041
        %1043 = vmatmul.f32.gmra.mxu0 %v932
        %v1044 = vpop.f32.mrf.mxu0
        %v1045 = vadd.f32 %v889, %v1044
        %1046 = vmatmul.f32.gmra.mxu0 %v935
        %v1047 = vpop.f32.mrf.mxu0
        %v1048 = vadd.f32 %v889, %v1047
        %1049 = vmatmul.f32.gmra.mxu0 %v938
        %v1050 = vpop.f32.mrf.mxu0
        %v1051 = vadd.f32 %v889, %v1050
        %1052 = vmatmul.f32.gmra.mxu0 %v941
        %v1053 = vpop.f32.mrf.mxu0
        %v1054 = vadd.f32 %v889, %v1053
        %1055 = vmatmul.f32.gmra.mxu0 %v944
        %v1056 = vpop.f32.mrf.mxu0
        %v1057 = vadd.f32 %v889, %v1056
        %1058 = vmatmul.f32.gmra.mxu0 %v947
        %v1059 = vpop.f32.mrf.mxu0
        %v1060 = vadd.f32 %v889, %v1059
        %1061 = vmatmul.f32.gmra.mxu0 %v950
        %v1062 = vpop.f32.mrf.mxu0
        %v1063 = vadd.f32 %v889, %v1062
        %1064 = vmatmul.f32.gmra.mxu0 %v953
        %v1065 = vpop.f32.mrf.mxu0
        %v1066 = vadd.f32 %v889, %v1065
        %1067 = vmatmul.f32.gmra.mxu0 %v956
        %v1068 = vpop.f32.mrf.mxu0
        %v1069 = vadd.f32 %v889, %v1068
        %1070 = vmatmul.f32.gmra.mxu0 %v959
        %v1071 = vpop.f32.mrf.mxu0
        %v1072 = vadd.f32 %v889, %v1071
        %1073 = vmatmul.f32.gmra.mxu0 %v962
        %v1074 = vpop.f32.mrf.mxu0
        %v1075 = vadd.f32 %v889, %v1074
        %1076 = vmatmul.f32.gmra.mxu0 %v965
        %v1077 = vpop.f32.mrf.mxu0
        %v1078 = vadd.f32 %v889, %v1077
        %1079 = vmatmul.f32.gmra.mxu0 %v968
        %v1080 = vpop.f32.mrf.mxu0
        %v1081 = vadd.f32 %v889, %v1080
        %1082 = vmatmul.f32.gmra.mxu0 %v971
        %v1083 = vpop.f32.mrf.mxu0
        %v1084 = vadd.f32 %v889, %v1083
        %1085 = vmatmul.f32.gmra.mxu0 %v974
        %v1086 = vpop.f32.mrf.mxu0
        %v1087 = vadd.f32 %v889, %v1086
        %1088 = vmatmul.f32.gmra.mxu0 %v977
        %v1089 = vpop.f32.mrf.mxu0
        %v1090 = vadd.f32 %v889, %v1089
        %1091 = vmatmul.f32.gmra.mxu0 %v980
        %v1092 = vpop.f32.mrf.mxu0
        %v1093 = vadd.f32 %v889, %v1092
        %1094 = vmatmul.f32.gmra.mxu0 %v983
        %v1095 = vpop.f32.mrf.mxu0
        %v1096 = vadd.f32 %v889, %v1095
        %1097 = vmatmul.f32.gmra.mxu0 %v986
        %v1098 = vpop.f32.mrf.mxu0
        %v1099 = vadd.f32 %v889, %v1098
        %1100 = vdwg.mxu0
        %v1101 = vmax.f32 %v1006, 0.0
        %v1102 = vmax.f32 %v1009, 0.0
        %v1103 = vmax.f32 %v1012, 0.0
        %v1104 = vmax.f32 %v1015, 0.0
        %v1105 = vmax.f32 %v1018, 0.0
        %v1106 = vmax.f32 %v1021, 0.0
        %v1107 = vmax.f32 %v1024, 0.0
        %v1108 = vmax.f32 %v1027, 0.0
        %v1109 = vmax.f32 %v1030, 0.0
        %v1110 = vmax.f32 %v1033, 0.0
        %v1111 = vmax.f32 %v1036, 0.0
        %v1112 = vmax.f32 %v1039, 0.0
        %v1113 = vmax.f32 %v1042, 0.0
        %v1114 = vmax.f32 %v1045, 0.0
        %v1115 = vmax.f32 %v1048, 0.0
        %v1116 = vmax.f32 %v1051, 0.0
        %v1117 = vmax.f32 %v1054, 0.0
        %v1118 = vmax.f32 %v1057, 0.0
        %v1119 = vmax.f32 %v1060, 0.0
        %v1120 = vmax.f32 %v1063, 0.0
        %v1121 = vmax.f32 %v1066, 0.0
        %v1122 = vmax.f32 %v1069, 0.0
        %v1123 = vmax.f32 %v1072, 0.0
        %v1124 = vmax.f32 %v1075, 0.0
        %v1125 = vmax.f32 %v1078, 0.0
        %v1126 = vmax.f32 %v1081, 0.0
        %v1127 = vmax.f32 %v1084, 0.0
        %v1128 = vmax.f32 %v1087, 0.0
        %v1129 = vmax.f32 %v1090, 0.0
        %v1130 = vmax.f32 %v1093, 0.0
        %v1131 = vmax.f32 %v1096, 0.0
        %v1132 = vmax.f32 %v1099, 0.0
        %v1133 = vld [vmem:[%s7] sm:$0xff]
        %v1134 = vld [vmem:[%s7 + $0x8] sm:$0xff]
        %v1135 = vld [vmem:[%s8] sm:$0x1]
        %v1137 = vperm.slane %v1135, 0
        %v1140 = vsel %vm644, %v1101, 0
        %v1143 = vsel %vm644, %v1102, 0
        %v1146 = vsel %vm644, %v1103, 0
        %v1149 = vsel %vm644, %v1104, 0
        %v1152 = vsel %vm644, %v1105, 0
        %v1155 = vsel %vm644, %v1106, 0
        %v1158 = vsel %vm644, %v1107, 0
        %v1161 = vsel %vm644, %v1108, 0
        %v1164 = vsel %vm644, %v1109, 0
        %v1167 = vsel %vm644, %v1110, 0
        %v1170 = vsel %vm644, %v1111, 0
        %v1173 = vsel %vm644, %v1112, 0
        %v1176 = vsel %vm644, %v1113, 0
        %v1179 = vsel %vm644, %v1114, 0
        %v1182 = vsel %vm644, %v1115, 0
        %v1185 = vsel %vm644, %v1116, 0
        %v1188 = vsel %vm644, %v1117, 0
        %v1191 = vsel %vm644, %v1118, 0
        %v1194 = vsel %vm644, %v1119, 0
        %v1197 = vsel %vm644, %v1120, 0
        %v1200 = vsel %vm644, %v1121, 0
        %v1203 = vsel %vm644, %v1122, 0
        %v1206 = vsel %vm644, %v1123, 0
        %v1209 = vsel %vm644, %v1124, 0
        %v1212 = vsel %vm644, %v1125, 0
        %v1215 = vsel %vm644, %v1126, 0
        %v1218 = vsel %vm644, %v1127, 0
        %v1221 = vsel %vm644, %v1128, 0
        %v1224 = vsel %vm644, %v1129, 0
        %v1227 = vsel %vm644, %v1130, 0
        %v1230 = vsel %vm644, %v1131, 0
        %v1233 = vsel %vm644, %v1132, 0
        %1235 = vmatpush.msra.mxu0 0.0
        %1236 = vmatpush.msra.mxu0 0.0
        %1237 = vmatpush.msra.mxu0 0.0
        %1238 = vmatpush.msra.mxu0 0.0
        %1239 = vmatpush.msra.mxu0 0.0
        %1240 = vmatpush.msra.mxu0 0.0
        %1241 = vmatpush.msra.mxu0 0.0
        %1242 = vmatpush.msra.mxu0 0.0
        %1243 = vmatpush.msra.mxu0 0.0
        %1244 = vmatpush.msra.mxu0 0.0
        %1245 = vmatpush.msra.mxu0 0.0
        %1246 = vmatpush.msra.mxu0 0.0
        %1247 = vmatpush.msra.mxu0 0.0
        %1248 = vmatpush.msra.mxu0 0.0
        %1249 = vmatpush.msra.mxu0 %v1134
        %1250 = vmatpush.msra.mxu0 %v1133
        %1251 = vmatmul.f32.gmra.mxu0 %v1140
        %v1252 = vpop.f32.mrf.mxu0
        %v1253 = vadd.f32 %v1137, %v1252
        %1254 = vmatmul.f32.gmra.mxu0 %v1143
        %v1255 = vpop.f32.mrf.mxu0
        %v1256 = vadd.f32 %v1137, %v1255
        %1257 = vmatmul.f32.gmra.mxu0 %v1146
        %v1258 = vpop.f32.mrf.mxu0
        %v1259 = vadd.f32 %v1137, %v1258
        %1260 = vmatmul.f32.gmra.mxu0 %v1149
        %v1261 = vpop.f32.mrf.mxu0
        %v1262 = vadd.f32 %v1137, %v1261
        %1263 = vmatmul.f32.gmra.mxu0 %v1152
        %v1264 = vpop.f32.mrf.mxu0
        %v1265 = vadd.f32 %v1137, %v1264
        %1266 = vmatmul.f32.gmra.mxu0 %v1155
        %v1267 = vpop.f32.mrf.mxu0
        %v1268 = vadd.f32 %v1137, %v1267
        %1269 = vmatmul.f32.gmra.mxu0 %v1158
        %v1270 = vpop.f32.mrf.mxu0
        %v1271 = vadd.f32 %v1137, %v1270
        %1272 = vmatmul.f32.gmra.mxu0 %v1161
        %v1273 = vpop.f32.mrf.mxu0
        %v1274 = vadd.f32 %v1137, %v1273
        %1275 = vmatmul.f32.gmra.mxu0 %v1164
        %v1276 = vpop.f32.mrf.mxu0
        %v1277 = vadd.f32 %v1137, %v1276
        %1278 = vmatmul.f32.gmra.mxu0 %v1167
        %v1279 = vpop.f32.mrf.mxu0
        %v1280 = vadd.f32 %v1137, %v1279
        %1281 = vmatmul.f32.gmra.mxu0 %v1170
        %v1282 = vpop.f32.mrf.mxu0
        %v1283 = vadd.f32 %v1137, %v1282
        %1284 = vmatmul.f32.gmra.mxu0 %v1173
        %v1285 = vpop.f32.mrf.mxu0
        %v1286 = vadd.f32 %v1137, %v1285
        %1287 = vmatmul.f32.gmra.mxu0 %v1176
        %v1288 = vpop.f32.mrf.mxu0
        %v1289 = vadd.f32 %v1137, %v1288
        %1290 = vmatmul.f32.gmra.mxu0 %v1179
        %v1291 = vpop.f32.mrf.mxu0
        %v1292 = vadd.f32 %v1137, %v1291
        %1293 = vmatmul.f32.gmra.mxu0 %v1182
        %v1294 = vpop.f32.mrf.mxu0
        %v1295 = vadd.f32 %v1137, %v1294
        %1296 = vmatmul.f32.gmra.mxu0 %v1185
        %v1297 = vpop.f32.mrf.mxu0
        %v1298 = vadd.f32 %v1137, %v1297
        %1299 = vmatmul.f32.gmra.mxu0 %v1188
        %v1300 = vpop.f32.mrf.mxu0
        %v1301 = vadd.f32 %v1137, %v1300
        %1302 = vmatmul.f32.gmra.mxu0 %v1191
        %v1303 = vpop.f32.mrf.mxu0
        %v1304 = vadd.f32 %v1137, %v1303
        %1305 = vmatmul.f32.gmra.mxu0 %v1194
        %v1306 = vpop.f32.mrf.mxu0
        %v1307 = vadd.f32 %v1137, %v1306
        %1308 = vmatmul.f32.gmra.mxu0 %v1197
        %v1309 = vpop.f32.mrf.mxu0
        %v1310 = vadd.f32 %v1137, %v1309
        %1311 = vmatmul.f32.gmra.mxu0 %v1200
        %v1312 = vpop.f32.mrf.mxu0
        %v1313 = vadd.f32 %v1137, %v1312
        %1314 = vmatmul.f32.gmra.mxu0 %v1203
        %v1315 = vpop.f32.mrf.mxu0
        %v1316 = vadd.f32 %v1137, %v1315
        %1317 = vmatmul.f32.gmra.mxu0 %v1206
        %v1318 = vpop.f32.mrf.mxu0
        %v1319 = vadd.f32 %v1137, %v1318
        %1320 = vmatmul.f32.gmra.mxu0 %v1209
        %v1321 = vpop.f32.mrf.mxu0
        %v1322 = vadd.f32 %v1137, %v1321
        %1323 = vmatmul.f32.gmra.mxu0 %v1212
        %v1324 = vpop.f32.mrf.mxu0
        %v1325 = vadd.f32 %v1137, %v1324
        %1326 = vmatmul.f32.gmra.mxu0 %v1215
        %v1327 = vpop.f32.mrf.mxu0
        %v1328 = vadd.f32 %v1137, %v1327
        %1329 = vmatmul.f32.gmra.mxu0 %v1218
        %v1330 = vpop.f32.mrf.mxu0
        %v1331 = vadd.f32 %v1137, %v1330
        %1332 = vmatmul.f32.gmra.mxu0 %v1221
        %v1333 = vpop.f32.mrf.mxu0
        %v1334 = vadd.f32 %v1137, %v1333
        %1335 = vmatmul.f32.gmra.mxu0 %v1224
        %v1336 = vpop.f32.mrf.mxu0
        %v1337 = vadd.f32 %v1137, %v1336
        %1338 = vmatmul.f32.gmra.mxu0 %v1227
        %v1339 = vpop.f32.mrf.mxu0
        %v1340 = vadd.f32 %v1137, %v1339
        %1341 = vmatmul.f32.gmra.mxu0 %v1230
        %v1342 = vpop.f32.mrf.mxu0
        %v1343 = vadd.f32 %v1137, %v1342
        %1344 = vmatmul.f32.gmra.mxu0 %v1233
        %v1345 = vpop.f32.mrf.mxu0
        %v1346 = vadd.f32 %v1137, %v1345
        %1347 = vdwg.mxu0
        %1348 = vst.msk [vmem:[%s334] sm:$0xff] %vm392, %v1253
        %1349 = vst.msk [vmem:[%s334 + $0x8] sm:$0xff] %vm392, %v1256
        %1350 = vst.msk [vmem:[%s334 + $0x10] sm:$0xff] %vm392, %v1259
        %1351 = vst.msk [vmem:[%s334 + $0x18] sm:$0xff] %vm392, %v1262
        %1352 = vst.msk [vmem:[%s334 + $0x20] sm:$0xff] %vm392, %v1265
        %1353 = vst.msk [vmem:[%s334 + $0x28] sm:$0xff] %vm392, %v1268
        %1354 = vst.msk [vmem:[%s334 + $0x30] sm:$0xff] %vm392, %v1271
        %1355 = vst.msk [vmem:[%s334 + $0x38] sm:$0xff] %vm392, %v1274
        %1356 = vst.msk [vmem:[%s334 + $0x40] sm:$0xff] %vm392, %v1277
        %1357 = vst.msk [vmem:[%s334 + $0x48] sm:$0xff] %vm392, %v1280
        %1358 = vst.msk [vmem:[%s334 + $0x50] sm:$0xff] %vm392, %v1283
        %1359 = vst.msk [vmem:[%s334 + $0x58] sm:$0xff] %vm392, %v1286
        %1360 = vst.msk [vmem:[%s334 + $0x60] sm:$0xff] %vm392, %v1289
        %1361 = vst.msk [vmem:[%s334 + $0x68] sm:$0xff] %vm392, %v1292
        %1362 = vst.msk [vmem:[%s334 + $0x70] sm:$0xff] %vm392, %v1295
        %1363 = vst.msk [vmem:[%s334 + $0x78] sm:$0xff] %vm392, %v1298
        %1364 = vst.msk [vmem:[%s334 + $0x80] sm:$0xff] %vm392, %v1301
        %1365 = vst.msk [vmem:[%s334 + $0x88] sm:$0xff] %vm392, %v1304
        %1366 = vst.msk [vmem:[%s334 + $0x90] sm:$0xff] %vm392, %v1307
        %1367 = vst.msk [vmem:[%s334 + $0x98] sm:$0xff] %vm392, %v1310
        %1368 = vst.msk [vmem:[%s334 + $0xa0] sm:$0xff] %vm392, %v1313
        %1369 = vst.msk [vmem:[%s334 + $0xa8] sm:$0xff] %vm392, %v1316
        %1370 = vst.msk [vmem:[%s334 + $0xb0] sm:$0xff] %vm392, %v1319
        %1371 = vst.msk [vmem:[%s334 + $0xb8] sm:$0xff] %vm392, %v1322
        %1372 = vst.msk [vmem:[%s334 + $0xc0] sm:$0xff] %vm392, %v1325
        %1373 = vst.msk [vmem:[%s334 + $0xc8] sm:$0xff] %vm392, %v1328
        %1374 = vst.msk [vmem:[%s334 + $0xd0] sm:$0xff] %vm392, %v1331
        %1375 = vst.msk [vmem:[%s334 + $0xd8] sm:$0xff] %vm392, %v1334
        %1376 = vst.msk [vmem:[%s334 + $0xe0] sm:$0xff] %vm392, %v1337
        %1377 = vst.msk [vmem:[%s334 + $0xe8] sm:$0xff] %vm392, %v1340
        %1378 = vst.msk [vmem:[%s334 + $0xf0] sm:$0xff] %vm392, %v1343
        %1379 = vst.msk [vmem:[%s334 + $0xf8] sm:$0xff] %vm392, %v1346
        %s1380 = sand.u32 %s222, 1
        %s1381 = sand.u32 %s222, 1
        %s1382 = smul.addr %s1381, 256
        %s1383 = scalar_lea.vmem [#allocation2], %s1382
        // Predicated region
        $region57: #{tpu_custom_call.1} parent=55 // pred_check
          %p1384 = pneg %p232
        $region58: #{tpu_custom_call.1} parent=55 // pred_check_branch
          %1386 = sbr.rel (%p1384) target = $region60
        $region59: #{tpu_custom_call.1} parent=55 // pred_region
          %s1387 = smul.u32 32, %s20
          %s1388 = ssub.s32 38, %s1387
          %p1389 = scmp.lt.s32.totalorder %s1388, 32
          %s1390 = scalar_select %p1389, %s1388, 32
          %s1391 = smul.u32 8, %s1390
          %p1392 = scmp.ne.s32.totalorder 0, %s1391
          %s1393 = smul.addr %s1387, 8
          %s1394 = scalar_lea.vmem %s9, %s1393
          // Predicated region
          $region61: #{tpu_custom_call.1} parent=59 // pred_check
            %p1395 = pneg %p1392
          $region62: #{tpu_custom_call.1} parent=59 // pred_check_branch
            %1397 = sbr.rel (%p1395) target = $region64
          $region63: #{tpu_custom_call.1} parent=59 // pred_region
            // Predicated region
            $region65: #{tpu_custom_call.1} parent=63 // pred_check
              _
            $region66: #{tpu_custom_call.1} parent=63 // pred_check_branch
              %1399 = sbr.rel (0) target = $region68
            $region67: #{tpu_custom_call.1} parent=63 // pred_region
              // Predicated region
              $region87: #{tpu_custom_call.1} parent=67 // pred_check
                _
              $region88: #{tpu_custom_call.1} parent=67 // pred_check_branch
                %1511 = sbr.rel (0) target = $region90
              $region89: #{tpu_custom_call.1} parent=67 // pred_region
                %s1512 = sshrl.u32 %s1390, 5
                // While loop
                $region91: #{tpu_custom_call.1} parent=89 // loop_pre_header
                  _
                $region92: #{tpu_custom_call.1} parent=89 // loop_header
                  %s1514 = sphi 0, %s1516
                  %p1515 = scmp.ge.s32.totalorder %s1514, %s1512
                  %s1519 = sphi 0, %s1588
                  %s1520 = sphi %s1383, %s1591
                  %s1521 = sphi %s1394, %s1592
                $region93: #{tpu_custom_call.1} parent=89 // loop_header_branch
                  %1518 = sbr.rel (%p1515) target = $region97
                $region94: #{tpu_custom_call.1} parent=89 // loop_body
                  %v1522 = vld [vmem:[%s1520] sm:$0xff]
                  %1523 = vst [vmem:[%s1521] sm:$0xff] %v1522
                  %v1524 = vld [vmem:[%s1520 + $0x8] sm:$0xff]
                  %1525 = vst [vmem:[%s1521 + $0x8] sm:$0xff] %v1524
                  %v1526 = vld [vmem:[%s1520 + $0x10] sm:$0xff]
                  %1527 = vst [vmem:[%s1521 + $0x10] sm:$0xff] %v1526
                  %v1528 = vld [vmem:[%s1520 + $0x18] sm:$0xff]
                  %1529 = vst [vmem:[%s1521 + $0x18] sm:$0xff] %v1528
                  %v1530 = vld [vmem:[%s1520 + $0x20] sm:$0xff]
                  %1531 = vst [vmem:[%s1521 + $0x20] sm:$0xff] %v1530
                  %v1532 = vld [vmem:[%s1520 + $0x28] sm:$0xff]
                  %1533 = vst [vmem:[%s1521 + $0x28] sm:$0xff] %v1532
                  %v1534 = vld [vmem:[%s1520 + $0x30] sm:$0xff]
                  %1535 = vst [vmem:[%s1521 + $0x30] sm:$0xff] %v1534
                  %v1536 = vld [vmem:[%s1520 + $0x38] sm:$0xff]
                  %1537 = vst [vmem:[%s1521 + $0x38] sm:$0xff] %v1536
                  %v1538 = vld [vmem:[%s1520 + $0x40] sm:$0xff]
                  %1539 = vst [vmem:[%s1521 + $0x40] sm:$0xff] %v1538
                  %v1540 = vld [vmem:[%s1520 + $0x48] sm:$0xff]
                  %1541 = vst [vmem:[%s1521 + $0x48] sm:$0xff] %v1540
                  %v1542 = vld [vmem:[%s1520 + $0x50] sm:$0xff]
                  %1543 = vst [vmem:[%s1521 + $0x50] sm:$0xff] %v1542
                  %v1544 = vld [vmem:[%s1520 + $0x58] sm:$0xff]
                  %1545 = vst [vmem:[%s1521 + $0x58] sm:$0xff] %v1544
                  %v1546 = vld [vmem:[%s1520 + $0x60] sm:$0xff]
                  %1547 = vst [vmem:[%s1521 + $0x60] sm:$0xff] %v1546
                  %v1548 = vld [vmem:[%s1520 + $0x68] sm:$0xff]
                  %1549 = vst [vmem:[%s1521 + $0x68] sm:$0xff] %v1548
                  %v1550 = vld [vmem:[%s1520 + $0x70] sm:$0xff]
                  %1551 = vst [vmem:[%s1521 + $0x70] sm:$0xff] %v1550
                  %v1552 = vld [vmem:[%s1520 + $0x78] sm:$0xff]
                  %1553 = vst [vmem:[%s1521 + $0x78] sm:$0xff] %v1552
                  %v1554 = vld [vmem:[%s1520 + $0x80] sm:$0xff]
                  %1555 = vst [vmem:[%s1521 + $0x80] sm:$0xff] %v1554
                  %v1556 = vld [vmem:[%s1520 + $0x88] sm:$0xff]
                  %1557 = vst [vmem:[%s1521 + $0x88] sm:$0xff] %v1556
                  %v1558 = vld [vmem:[%s1520 + $0x90] sm:$0xff]
                  %1559 = vst [vmem:[%s1521 + $0x90] sm:$0xff] %v1558
                  %v1560 = vld [vmem:[%s1520 + $0x98] sm:$0xff]
                  %1561 = vst [vmem:[%s1521 + $0x98] sm:$0xff] %v1560
                  %v1562 = vld [vmem:[%s1520 + $0xa0] sm:$0xff]
                  %1563 = vst [vmem:[%s1521 + $0xa0] sm:$0xff] %v1562
                  %v1564 = vld [vmem:[%s1520 + $0xa8] sm:$0xff]
                  %1565 = vst [vmem:[%s1521 + $0xa8] sm:$0xff] %v1564
                  %v1566 = vld [vmem:[%s1520 + $0xb0] sm:$0xff]
                  %1567 = vst [vmem:[%s1521 + $0xb0] sm:$0xff] %v1566
                  %v1568 = vld [vmem:[%s1520 + $0xb8] sm:$0xff]
                  %1569 = vst [vmem:[%s1521 + $0xb8] sm:$0xff] %v1568
                  %v1570 = vld [vmem:[%s1520 + $0xc0] sm:$0xff]
                  %1571 = vst [vmem:[%s1521 + $0xc0] sm:$0xff] %v1570
                  %v1572 = vld [vmem:[%s1520 + $0xc8] sm:$0xff]
                  %1573 = vst [vmem:[%s1521 + $0xc8] sm:$0xff] %v1572
                  %v1574 = vld [vmem:[%s1520 + $0xd0] sm:$0xff]
                  %1575 = vst [vmem:[%s1521 + $0xd0] sm:$0xff] %v1574
                  %v1576 = vld [vmem:[%s1520 + $0xd8] sm:$0xff]
                  %1577 = vst [vmem:[%s1521 + $0xd8] sm:$0xff] %v1576
                  %v1578 = vld [vmem:[%s1520 + $0xe0] sm:$0xff]
                  %1579 = vst [vmem:[%s1521 + $0xe0] sm:$0xff] %v1578
                  %v1580 = vld [vmem:[%s1520 + $0xe8] sm:$0xff]
                  %1581 = vst [vmem:[%s1521 + $0xe8] sm:$0xff] %v1580
                  %v1582 = vld [vmem:[%s1520 + $0xf0] sm:$0xff]
                  %1583 = vst [vmem:[%s1521 + $0xf0] sm:$0xff] %v1582
                  %v1584 = vld [vmem:[%s1520 + $0xf8] sm:$0xff]
                  %1585 = vst [vmem:[%s1521 + $0xf8] sm:$0xff] %v1584
                  %s1586 = sadd.s32 1, %s1519
                  %p1587 = scmp.ge.s32.totalorder %s1586, %s1512
                  %s1588 = scalar_select %p1587, 0, %s1586
                  %s1589 = smul.u32 %s1588, 256
                  %s1590 = smul.u32 %s1588, 256
                  %s1591 = scalar_lea.vmem %s1383, %s1589 [#allocation2]
                  %s1592 = scalar_lea.vmem %s1394, %s1590
                $region95: #{tpu_custom_call.1} parent=89 // loop_footer
                  %s1516 = sadd.s32 %s1514, 1
                $region96: #{tpu_custom_call.1} parent=89 // loop_footer_branch
                  %1513 = sbr.rel target = $region92
                $region97: #{tpu_custom_call.1} parent=89 // loop_exit
                  _
                %s1593 = sshrl.u32 %s1390, 5
                %s1594 = sand.u32 %s1390, 31
                %s1595 = smul.u32 %s1593, 32
                %s1596 = smul.u32 8, %s1595
                %s1597 = scalar_lea.vmem %s1383, %s1596 [#allocation2]
                %s1598 = smul.u32 8, %s1595
                %s1599 = scalar_lea.vmem %s1394, %s1598
                // While loop
                $region98: #{tpu_custom_call.1} parent=89 // loop_pre_header
                  _
                $region99: #{tpu_custom_call.1} parent=89 // loop_header
                  %s1601 = sphi 0, %s1603
                  %p1602 = scmp.ge.s32.totalorder %s1601, %s1594
                  %s1606 = sphi 0, %s1613
                  %s1607 = sphi %s1597, %s1616
                  %s1608 = sphi %s1599, %s1617
                $region100: #{tpu_custom_call.1} parent=89 // loop_header_branch
                  %1605 = sbr.rel (%p1602) target = $region104
                $region101: #{tpu_custom_call.1} parent=89 // loop_body
                  %v1609 = vld [vmem:[%s1607] sm:$0xff]
                  %1610 = vst [vmem:[%s1608] sm:$0xff] %v1609
                  %s1611 = sadd.s32 1, %s1606
                  %p1612 = scmp.ge.s32.totalorder %s1611, %s1594
                  %s1613 = scalar_select %p1612, 0, %s1611
                  %s1614 = smul.u32 %s1613, 8
                  %s1615 = smul.u32 %s1613, 8
                  %s1616 = scalar_lea.vmem %s1597, %s1614 [#allocation2]
                  %s1617 = scalar_lea.vmem %s1599, %s1615
                $region102: #{tpu_custom_call.1} parent=89 // loop_footer
                  %s1603 = sadd.s32 %s1601, 1
                $region103: #{tpu_custom_call.1} parent=89 // loop_footer_branch
                  %1600 = sbr.rel target = $region99
                $region104: #{tpu_custom_call.1} parent=89 // loop_exit
                  _
              $region90: #{tpu_custom_call.1} parent=67 // pred_fallthru
                _
              // Predicated region
              $region105: #{tpu_custom_call.1} parent=67 // pred_check
                _
              $region106: #{tpu_custom_call.1} parent=67 // pred_check_branch
                %1619 = sbr.rel target = $region108
              $region107: #{tpu_custom_call.1} parent=67 // pred_region
                _
              $region108: #{tpu_custom_call.1} parent=67 // pred_fallthru
                _
            $region68: #{tpu_custom_call.1} parent=63 // pred_fallthru
              _
            // Predicated region
            $region69: #{tpu_custom_call.1} parent=63 // pred_check
              _
            $region70: #{tpu_custom_call.1} parent=63 // pred_check_branch
              %1401 = sbr.rel target = $region72
            $region71: #{tpu_custom_call.1} parent=63 // pred_region
              %s1403 = ssub.s32 256, 1
              %s1404 = sshrl.u32 %s1390, 5
              // While loop
              $region73: #{tpu_custom_call.1} parent=71 // loop_pre_header
                _
              $region74: #{tpu_custom_call.1} parent=71 // loop_header
                %s1406 = sphi 0, %s1408
                %p1407 = scmp.ge.s32.totalorder %s1406, %s1404
                %s1411 = sphi 0, %s1480
                %s1412 = sphi %s1383, %s1483
                %s1413 = sphi %s1394, %s1484
              $region75: #{tpu_custom_call.1} parent=71 // loop_header_branch
                %1410 = sbr.rel (%p1407) target = $region79
              $region76: #{tpu_custom_call.1} parent=71 // loop_body
                %v1414 = vld [vmem:[%s1412] sm:%s1403]
                %1415 = vst [vmem:[%s1413] sm:%s1403] %v1414
                %v1416 = vld [vmem:[%s1412 + $0x8] sm:%s1403]
                %1417 = vst [vmem:[%s1413 + $0x8] sm:%s1403] %v1416
                %v1418 = vld [vmem:[%s1412 + $0x10] sm:%s1403]
                %1419 = vst [vmem:[%s1413 + $0x10] sm:%s1403] %v1418
                %v1420 = vld [vmem:[%s1412 + $0x18] sm:%s1403]
                %1421 = vst [vmem:[%s1413 + $0x18] sm:%s1403] %v1420
                %v1422 = vld [vmem:[%s1412 + $0x20] sm:%s1403]
                %1423 = vst [vmem:[%s1413 + $0x20] sm:%s1403] %v1422
                %v1424 = vld [vmem:[%s1412 + $0x28] sm:%s1403]
                %1425 = vst [vmem:[%s1413 + $0x28] sm:%s1403] %v1424
                %v1426 = vld [vmem:[%s1412 + $0x30] sm:%s1403]
                %1427 = vst [vmem:[%s1413 + $0x30] sm:%s1403] %v1426
                %v1428 = vld [vmem:[%s1412 + $0x38] sm:%s1403]
                %1429 = vst [vmem:[%s1413 + $0x38] sm:%s1403] %v1428
                %v1430 = vld [vmem:[%s1412 + $0x40] sm:%s1403]
                %1431 = vst [vmem:[%s1413 + $0x40] sm:%s1403] %v1430
                %v1432 = vld [vmem:[%s1412 + $0x48] sm:%s1403]
                %1433 = vst [vmem:[%s1413 + $0x48] sm:%s1403] %v1432
                %v1434 = vld [vmem:[%s1412 + $0x50] sm:%s1403]
                %1435 = vst [vmem:[%s1413 + $0x50] sm:%s1403] %v1434
                %v1436 = vld [vmem:[%s1412 + $0x58] sm:%s1403]
                %1437 = vst [vmem:[%s1413 + $0x58] sm:%s1403] %v1436
                %v1438 = vld [vmem:[%s1412 + $0x60] sm:%s1403]
                %1439 = vst [vmem:[%s1413 + $0x60] sm:%s1403] %v1438
                %v1440 = vld [vmem:[%s1412 + $0x68] sm:%s1403]
                %1441 = vst [vmem:[%s1413 + $0x68] sm:%s1403] %v1440
                %v1442 = vld [vmem:[%s1412 + $0x70] sm:%s1403]
                %1443 = vst [vmem:[%s1413 + $0x70] sm:%s1403] %v1442
                %v1444 = vld [vmem:[%s1412 + $0x78] sm:%s1403]
                %1445 = vst [vmem:[%s1413 + $0x78] sm:%s1403] %v1444
                %v1446 = vld [vmem:[%s1412 + $0x80] sm:%s1403]
                %1447 = vst [vmem:[%s1413 + $0x80] sm:%s1403] %v1446
                %v1448 = vld [vmem:[%s1412 + $0x88] sm:%s1403]
                %1449 = vst [vmem:[%s1413 + $0x88] sm:%s1403] %v1448
                %v1450 = vld [vmem:[%s1412 + $0x90] sm:%s1403]
                %1451 = vst [vmem:[%s1413 + $0x90] sm:%s1403] %v1450
                %v1452 = vld [vmem:[%s1412 + $0x98] sm:%s1403]
                %1453 = vst [vmem:[%s1413 + $0x98] sm:%s1403] %v1452
                %v1454 = vld [vmem:[%s1412 + $0xa0] sm:%s1403]
                %1455 = vst [vmem:[%s1413 + $0xa0] sm:%s1403] %v1454
                %v1456 = vld [vmem:[%s1412 + $0xa8] sm:%s1403]
                %1457 = vst [vmem:[%s1413 + $0xa8] sm:%s1403] %v1456
                %v1458 = vld [vmem:[%s1412 + $0xb0] sm:%s1403]
                %1459 = vst [vmem:[%s1413 + $0xb0] sm:%s1403] %v1458
                %v1460 = vld [vmem:[%s1412 + $0xb8] sm:%s1403]
                %1461 = vst [vmem:[%s1413 + $0xb8] sm:%s1403] %v1460
                %v1462 = vld [vmem:[%s1412 + $0xc0] sm:%s1403]
                %1463 = vst [vmem:[%s1413 + $0xc0] sm:%s1403] %v1462
                %v1464 = vld [vmem:[%s1412 + $0xc8] sm:%s1403]
                %1465 = vst [vmem:[%s1413 + $0xc8] sm:%s1403] %v1464
                %v1466 = vld [vmem:[%s1412 + $0xd0] sm:%s1403]
                %1467 = vst [vmem:[%s1413 + $0xd0] sm:%s1403] %v1466
                %v1468 = vld [vmem:[%s1412 + $0xd8] sm:%s1403]
                %1469 = vst [vmem:[%s1413 + $0xd8] sm:%s1403] %v1468
                %v1470 = vld [vmem:[%s1412 + $0xe0] sm:%s1403]
                %1471 = vst [vmem:[%s1413 + $0xe0] sm:%s1403] %v1470
                %v1472 = vld [vmem:[%s1412 + $0xe8] sm:%s1403]
                %1473 = vst [vmem:[%s1413 + $0xe8] sm:%s1403] %v1472
                %v1474 = vld [vmem:[%s1412 + $0xf0] sm:%s1403]
                %1475 = vst [vmem:[%s1413 + $0xf0] sm:%s1403] %v1474
                %v1476 = vld [vmem:[%s1412 + $0xf8] sm:%s1403]
                %1477 = vst [vmem:[%s1413 + $0xf8] sm:%s1403] %v1476
                %s1478 = sadd.s32 1, %s1411
                %p1479 = scmp.ge.s32.totalorder %s1478, %s1404
                %s1480 = scalar_select %p1479, 0, %s1478
                %s1481 = smul.u32 %s1480, 256
                %s1482 = smul.u32 %s1480, 256
                %s1483 = scalar_lea.vmem %s1383, %s1481 [#allocation2]
                %s1484 = scalar_lea.vmem %s1394, %s1482
              $region77: #{tpu_custom_call.1} parent=71 // loop_footer
                %s1408 = sadd.s32 %s1406, 1
              $region78: #{tpu_custom_call.1} parent=71 // loop_footer_branch
                %1405 = sbr.rel target = $region74
              $region79: #{tpu_custom_call.1} parent=71 // loop_exit
                _
              %s1485 = sshrl.u32 %s1390, 5
              %s1486 = sand.u32 %s1390, 31
              %s1487 = smul.u32 %s1485, 32
              %s1488 = smul.u32 8, %s1487
              %s1489 = scalar_lea.vmem %s1383, %s1488 [#allocation2]
              %s1490 = smul.u32 8, %s1487
              %s1491 = scalar_lea.vmem %s1394, %s1490
              // While loop
              $region80: #{tpu_custom_call.1} parent=71 // loop_pre_header
                _
              $region81: #{tpu_custom_call.1} parent=71 // loop_header
                %s1493 = sphi 0, %s1495
                %p1494 = scmp.ge.s32.totalorder %s1493, %s1486
                %s1498 = sphi 0, %s1505
                %s1499 = sphi %s1489, %s1508
                %s1500 = sphi %s1491, %s1509
              $region82: #{tpu_custom_call.1} parent=71 // loop_header_branch
                %1497 = sbr.rel (%p1494) target = $region86
              $region83: #{tpu_custom_call.1} parent=71 // loop_body
                %v1501 = vld [vmem:[%s1499] sm:%s1403]
                %1502 = vst [vmem:[%s1500] sm:%s1403] %v1501
                %s1503 = sadd.s32 1, %s1498
                %p1504 = scmp.ge.s32.totalorder %s1503, %s1486
                %s1505 = scalar_select %p1504, 0, %s1503
                %s1506 = smul.u32 %s1505, 8
                %s1507 = smul.u32 %s1505, 8
                %s1508 = scalar_lea.vmem %s1489, %s1506 [#allocation2]
                %s1509 = scalar_lea.vmem %s1491, %s1507
              $region84: #{tpu_custom_call.1} parent=71 // loop_footer
                %s1495 = sadd.s32 %s1493, 1
              $region85: #{tpu_custom_call.1} parent=71 // loop_footer_branch
                %1492 = sbr.rel target = $region81
              $region86: #{tpu_custom_call.1} parent=71 // loop_exit
                _
            $region72: #{tpu_custom_call.1} parent=63 // pred_fallthru
              _
          $region64: #{tpu_custom_call.1} parent=59 // pred_fallthru
            _
          %1620 = vnop
        $region60: #{tpu_custom_call.1} parent=55 // pred_fallthru
          _
      $region56: #{tpu_custom_call.1} parent=5 // pred_fallthru
        _
      %p1621 = scmp.le.s32.totalorder 2, %s15
      // Predicated region
      $region109: #{tpu_custom_call.1} parent=5 // pred_check
        %p1622 = pneg %p1621
      $region110: #{tpu_custom_call.1} parent=5 // pred_check_branch
        %1624 = sbr.rel (%p1622) target = $region112
      $region111: #{tpu_custom_call.1} parent=5 // pred_region
        %s1625 = ssub.s32 %s15, 2
        // Predicated region
        $region113: #{tpu_custom_call.1} parent=111 // pred_check
          %p1626 = pneg %p238
        $region114: #{tpu_custom_call.1} parent=111 // pred_check_branch
          %1628 = sbr.rel (%p1626) target = $region116
        $region115: #{tpu_custom_call.1} parent=111 // pred_region
          %s1629 = sand.u32 %s223, 1
          %s1630 = sand.u32 %s223, 1
          %s1631 = smul.addr %s1630, 256
          %s1632 = scalar_lea.vmem [#allocation2], %s1631
        $region116: #{tpu_custom_call.1} parent=111 // pred_fallthru
          _
      $region112: #{tpu_custom_call.1} parent=5 // pred_fallthru
        _
    $region6: #{tpu_custom_call.1} parent=1 // loop_footer
      %s19 = sadd.s32 1, %s15
    $region7: #{tpu_custom_call.1} parent=1 // loop_footer_branch
      %14 = sbr.rel target = $region3
    $region8: #{tpu_custom_call.1} parent=1 // loop_exit
      _

</llo_original>
